<compile_context>
chip_gen: v6e
topology: v6e:2x2x1
jax: 0.10.0
libtpu: 0.0.40
codegen_flags: <defaults>
</compile_context>

<pallas_src>
import functools

import jax
import jax.numpy as jnp
from jax import lax
from jax.experimental import pallas as pl
from jax.experimental.pallas import tpu as pltpu

_INV_SQRT2 = 0.7071067811865476
_ERF_C = (0.254829592, -0.284496736, 1.421413741, -1.453152027, 1.061405429)


# --------------------------------------------------------------------- in-kernel math
def _erf_in_kernel(x):
    # Abramowitz & Stegun 7.1.26 erf (max abs err ~1.5e-7).  Exact divide (no
    # approx-reciprocal) so end-to-end error stays well below 1e-3.
    a = jnp.abs(x)
    t = 1.0 / (1.0 + 0.3275911 * a)
    c0, c1, c2, c3, c4 = _ERF_C
    poly = t * (c0 + t * (c1 + t * (c2 + t * (c3 + t * c4))))
    y = 1.0 - poly * jnp.exp(-a * a)
    return jnp.where(x < 0.0, -y, y)


def _gelu_in_kernel(x):
    # exact (erf-based) GELU, matching torch.nn.GELU() default (approximate='none')
    return 0.5 * x * (1.0 + _erf_in_kernel(x * _INV_SQRT2))


def _sigmoid_in_kernel(x):
    return 1.0 / (1.0 + jnp.exp(-x))


# ----------------------------------------------------------------------------- kernel
def mbblock_kernel(x_ref, mask_ref, tab_ref, wcat_ref, seb1_ref, o_ref, *,
                   width, hw, imgs, cin_pad, chid):
    cexp = tab_ref.shape[0]
    L = imgs * hw                                  # fused lane extent of this grid step

    # Fuse the block's batch into the lane axis: x -> (Cin_pad, imgs*HW).
    x = jnp.concatenate([x_ref[n] for n in range(imgs)], axis=1)

    # Unpack the per-Cexp parameter table (static lane slices).
    tab = tab_ref[...]
    col = 0
    w1 = tab[:, col:col + cin_pad]; col += cin_pad       # expand weight, BN1 scale folded
    bn1b = tab[:, col:col + 1]; col += 1                 # BN1 shift
    wdw = tab[:, col:col + 9]; col += 9                  # depthwise taps, BN2 scale folded
    bn2b = tab[:, col:col + 1]; col += 1                 # BN2 shift
    sew1 = tab[:, col:col + chid]; col += chid           # SE fc1 weight^T
    sew2 = tab[:, col:col + chid]; col += chid           # SE fc2 weight
    seb2 = tab[:, col:col + 1]                           # SE fc2 bias

    # block[0]: 1x1 expand conv (bias=False) + folded BN + GELU — one lane-dense MXU dot.
    y = jnp.dot(w1, x, preferred_element_type=jnp.float32) + bn1b     # (Cexp, L)
    y = _gelu_in_kernel(y)

    # block[1]: depthwise 3x3 (stride 1, zero pad 1) + folded BN + GELU.
    # 9 taps = static XLU lane-rolls of the fused HW axis + border masks (which also
    # zero the taps that would wrap across image boundaries), accumulated in registers.
    acc = y * wdw[:, 4:5]                                  # centre tap: no roll, no mask
    for k in range(9):
        if k == 4:
            continue
        dy, dx = k // 3 - 1, k % 3 - 1
        off = dy * width + dx                              # flat offset of input tap
        tap = pltpu.roll(y, shift=(-off) % L, axis=1) * mask_ref[k:k + 1, :]
        acc = acc + tap * wdw[:, k:k + 1]
    y = _gelu_in_kernel(acc + bn2b)

    # block[2]: SqueezeExcitation (avgpool -> fc1 -> SiLU -> fc2 -> sigmoid -> scale).
    # Pool / gate are per image, so work on per-image lane slices (static, 128-aligned).
    # The tiny FCs are VPU/XLU reductions rather than MXU dots.
    seb1 = seb1_ref[...]                                   # (1, chid)
    inv_hw = 1.0 / hw
    gated = []
    for n in range(imgs):
        y_n = y[:, n * hw:(n + 1) * hw]
        pooled = jnp.sum(y_n, axis=1, keepdims=True) * inv_hw               # (Cexp, 1)
        s = jnp.sum(sew1 * pooled, axis=0, keepdims=True) + seb1            # (1, chid)
        s = s * _sigmoid_in_kernel(s)                                       # SiLU
        gate = jnp.sum(sew2 * s, axis=1, keepdims=True) + seb2              # (Cexp, 1)
        gated.append(y_n * _sigmoid_in_kernel(gate))
    y = jnp.concatenate(gated, axis=1) if imgs > 1 else gated[0]

    # block[3] + shortcut: single merged MXU matmul over [y ; x_pad], with both BN
    # scales folded into wcat and both BN shifts pre-summed into one bias column.
    stacked = jnp.concatenate([y, x], axis=0)                               # (Cexp+Cin_pad, L)
    wcat = wcat_ref[:, :cexp + cin_pad]
    bias = wcat_ref[:, cexp + cin_pad:cexp + cin_pad + 1]
    out = jnp.dot(wcat, stacked, preferred_element_type=jnp.float32) + bias  # (Cout, L)

    for n in range(imgs):                                   # full-tile lane-dense stores
        o_ref[n] = out[:, n * hw:(n + 1) * hw].astype(o_ref.dtype)


# ----------------------------------------------------------------------------- helpers
def _tap_masks(H, W, imgs):
    # mask[k, n*H*W + h*W + w] = 1.0 iff tap (ky,kx)=(k//3,k%3) reads inside image n.
    hh = jnp.arange(H, dtype=jnp.int32).reshape(H, 1)
    ww = jnp.arange(W, dtype=jnp.int32).reshape(1, W)
    rows = []
    for k in range(9):
        dy, dx = k // 3 - 1, k % 3 - 1
        valid = (hh + dy >= 0) & (hh + dy < H) & (ww + dx >= 0) & (ww + dx < W)
        rows.append(valid.reshape(-1))
    m = jnp.stack(rows, axis=0).astype(jnp.float32)          # (9, H*W)
    return jnp.tile(m, (1, imgs))                            # (9, imgs*H*W)


def _pack_params(params, cin, cin_pad):
    """Fold BN scales into the conv weights and pack everything into 3 arrays."""
    pad = ((0, 0), (0, cin_pad - cin))
    w1p = jnp.pad(params["w1"] * params["bn1s"], pad)        # (Cexp, Cin_pad)
    wdwp = params["wdw"] * params["bn2s"]                    # (Cexp, 9)
    w3p = params["w3"] * params["bn3s"]                      # (Cout, Cexp)
    wsp = jnp.pad(params["ws"] * params["bnss"], pad)        # (Cout, Cin_pad)
    bias = params["bn3b"] + params["bnsb"]                   # merged project+shortcut shift
    tab = jnp.concatenate([w1p, params["bn1b"], wdwp, params["bn2b"],
                           params["sew1"], params["sew2"], params["seb2"]],
                          axis=1).astype(jnp.float32)        # (Cexp, Cin_pad+12+2*chid)
    wcat = jnp.concatenate([w3p, wsp, bias], axis=1).astype(jnp.float32)  # (Cout, Cexp+Cin_pad+1)
    return tab, wcat, params["seb1"].astype(jnp.float32)


# ----------------------------------------------------------------------------- wrapper
def mbblock_forward(x_nchw, params, *, batch_blocks=1):
    """Fused MBBlock forward.

    batch_blocks: grid steps the fused batch is split into.  1 (default) minimizes
    fixed per-step overhead (v5e/v6e have a single TensorCore); use 2 on v7x so both
    TensorCores get a parallel step.
    """
    N, Cin, H, W = x_nchw.shape
    HW = H * W
    assert HW % 128 == 0, "H*W must be a multiple of 128 for lane-aligned image slices"
    assert N % batch_blocks == 0
    imgs = N // batch_blocks                      # images fused into lanes per grid step

    Cexp = params["w1"].shape[0]
    Cout = params["w3"].shape[0]
    chid = params["sew1"].shape[1]
    Cin_pad = ((Cin + 7) // 8) * 8                # 8-sublane alignment for the merged matmul

    # NCHW -> (N, Cin_pad, HW): free reshape + cheap zero-pad of the small channel dim.
    x3 = x_nchw.reshape(N, Cin, HW).astype(jnp.float32)
    if Cin_pad != Cin:
        x3 = jnp.pad(x3, ((0, 0), (0, Cin_pad - Cin), (0, 0)))

    masks = _tap_masks(H, W, imgs)                # (9, imgs*HW), shared by every grid step
    tab, wcat, seb1 = _pack_params(params, Cin, Cin_pad)

    in_specs = [
        pl.BlockSpec((imgs, Cin_pad, HW), lambda b: (b, 0, 0)),
        pl.BlockSpec(masks.shape, lambda b: (0, 0)),
        pl.BlockSpec(tab.shape, lambda b: (0, 0)),
        pl.BlockSpec(wcat.shape, lambda b: (0, 0)),
        pl.BlockSpec(seb1.shape, lambda b: (0, 0)),
    ]
    out_spec = pl.BlockSpec((imgs, Cout, HW), lambda b: (b, 0, 0))

    flops = int(2 * N * HW * (Cexp * Cin_pad + Cexp * 9 + Cout * (Cexp + Cin_pad))
                + 80 * Cexp * N * HW)
    cost = pl.CostEstimate(
        flops=flops,
        transcendentals=int(3 * Cexp * N * HW),
        bytes_accessed=int(4 * (N * Cin_pad * HW + N * Cout * HW
                                + masks.size + tab.size + wcat.size + seb1.size)))

    out2 = pl.pallas_call(
        functools.partial(mbblock_kernel, width=W, hw=HW, imgs=imgs,
                          cin_pad=Cin_pad, chid=chid),
        out_shape=jax.ShapeDtypeStruct((N, Cout, HW), jnp.float32),
        grid=(batch_blocks,),
        in_specs=in_specs,
        out_specs=out_spec,
        compiler_params=pltpu.CompilerParams(
            dimension_semantics=("parallel",),
            # Explicit scoped-VMEM limit so real-size tiles aren't silently capped by
            # the 16/32 MiB defaults; well under v7x's 64 MiB physical VMEM.
            vmem_limit_bytes=32 * 1024 * 1024),
        cost_estimate=cost,
    )(x3, masks, tab, wcat, seb1)

    return out2.reshape(N, Cout, H, W)            # free reshape back to NCHW


# ----------------------------------------------------------------------------- params
def init_params(key, in_channels, out_channels):
    cexp = in_channels * 4
    chid = cexp // 16                     # SqueezeExcitation hidden = (in_channels*4) // 16
    assert chid >= 1
    keys = iter(jax.random.split(key, 32))

    def nrm(shape, scale=0.1):
        return (scale * jax.random.normal(next(keys), shape)).astype(jnp.float32)

    def bn_fold(c, eps=1e-5):
        gamma = 1.0 + 0.1 * jax.random.normal(next(keys), (c,))
        beta = 0.1 * jax.random.normal(next(keys), (c,))
        mean = 0.1 * jax.random.normal(next(keys), (c,))
        var = 1.0 + 0.2 * jax.random.uniform(next(keys), (c,))
        scale = gamma * lax.rsqrt(var + eps)
        shift = beta - mean * scale
        return (scale.reshape(c, 1).astype(jnp.float32),
                shift.reshape(c, 1).astype(jnp.float32))

    p = {}
    p["w1"] = nrm((cexp, in_channels))            # 1x1 expand conv   (Cexp, Cin)
    p["bn1s"], p["bn1b"] = bn_fold(cexp)
    p["wdw"] = nrm((cexp, 9))                     # depthwise 3x3: row = channel, col = ky*3+kx
    p["bn2s"], p["bn2b"] = bn_fold(cexp)
    p["sew1"] = nrm((cexp, chid))                 # SE fc1 weight^T  (Cexp, chid)
    p["seb1"] = nrm((1, chid))
    p["sew2"] = nrm((cexp, chid))                 # SE fc2 weight    (Cexp, chid)
    p["seb2"] = nrm((cexp, 1))
    p["w3"] = nrm((out_channels, cexp))           # 1x1 project conv (Cout, Cexp)
    p["bn3s"], p["bn3b"] = bn_fold(out_channels)
    p["ws"] = nrm((out_channels, in_channels))    # shortcut 1x1 conv (Cout, Cin)
    p["bnss"], p["bnsb"] = bn_fold(out_channels)
    return p


# ----------------------------------------------------------------------------- reference
def mbblock_reference(x_nchw, params):
    hp = lax.Precision.HIGHEST
    erf = jax.scipy.special.erf

    def gelu(v):
        return 0.5 * v * (1.0 + erf(v * _INV_SQRT2))

    def bn(y, s, b):                               # y: (N,C,H,W); s,b: (C,1)
        return y * s.reshape(1, -1, 1, 1) + b.reshape(1, -1, 1, 1)

    x = x_nchw.astype(jnp.float32)
    Cexp = params["w1"].shape[0]

    y = gelu(bn(jnp.einsum("ec,nchw->nehw", params["w1"], x, precision=hp),
                params["bn1s"], params["bn1b"]))
    kdw = params["wdw"].T.reshape(3, 3, 1, Cexp)   # HWIO, I=1 (depthwise)
    y = lax.conv_general_dilated(y, kdw, window_strides=(1, 1), padding="SAME",
                                 dimension_numbers=("NCHW", "HWIO", "NCHW"),
                                 feature_group_count=Cexp, precision=hp)
    y = gelu(bn(y, params["bn2s"], params["bn2b"]))
    pooled = jnp.mean(y, axis=(2, 3))                                    # (N, Cexp)
    s = jnp.dot(pooled, params["sew1"], precision=hp) + params["seb1"]   # (N, chid)
    s = s * jax.nn.sigmoid(s)
    gate = jax.nn.sigmoid(jnp.einsum("nh,ch->nc", s, params["sew2"], precision=hp)
                          + params["seb2"].reshape(1, -1))               # (N, Cexp)
    y = y * gate[:, :, None, None]
    y = bn(jnp.einsum("oe,nehw->nohw", params["w3"], y, precision=hp),
           params["bn3s"], params["bn3b"])
    sc = bn(jnp.einsum("oc,nchw->nohw", params["ws"], x, precision=hp),
            params["bnss"], params["bnsb"])
    return y + sc


if __name__ == "__main__":
    key = jax.random.PRNGKey(0)
    kx, kp = jax.random.split(key)
    N, CIN, H, W, COUT = 2, 4, 16, 16, 8
    x = jax.random.normal(kx, (N, CIN, H, W), dtype=jnp.float32)      # PyTorch NCHW input
    params = init_params(kp, CIN, COUT)

    out = mbblock_forward(x, params)                                   # batch_blocks=2 on v7x
    out = jax.block_until_ready(out)
    assert out.shape == (N, COUT, H, W), out.shape

    ref = mbblock_reference(x, params)
    max_err = float(jnp.max(jnp.abs(out - ref)))
    assert max_err < 1e-3, f"mismatch vs reference: max abs err = {max_err}"
    print("KERNEL_OK")
</pallas_src>

<mosaic_0001>
module attributes {stable_mosaic.version = 11 : i64} {
  func.func @mbblock_kernel(%arg0: i32, %arg1: memref<2x8x256xf32, #tpu.memory_space<vmem>>, %arg2: memref<9x512xf32, #tpu.memory_space<vmem>>, %arg3: memref<16x22xf32, #tpu.memory_space<vmem>>, %arg4: memref<8x25xf32, #tpu.memory_space<vmem>>, %arg5: memref<1x1xf32, #tpu.memory_space<vmem>>, %arg6: memref<2x8x256xf32, #tpu.memory_space<vmem>>) attributes {dimension_semantics = [#tpu.dimension_semantics<parallel>], iteration_bounds = array<i64: 1>, scalar_prefetch = 0 : i64, scratch_operands = 0 : i64, tpu.core_type = #tpu.core_type<tc>, window_params = [{transform_indices = @transform_0, window_bounds = array<i64: 2, 8, 256>}, {pipeline_mode = #tpu.pipeline_mode<synchronous>, transform_indices = @transform_1, window_bounds = array<i64: 9, 512>}, {pipeline_mode = #tpu.pipeline_mode<synchronous>, transform_indices = @transform_2, window_bounds = array<i64: 16, 22>}, {pipeline_mode = #tpu.pipeline_mode<synchronous>, transform_indices = @transform_3, window_bounds = array<i64: 8, 25>}, {pipeline_mode = #tpu.pipeline_mode<synchronous>, transform_indices = @transform_4, window_bounds = array<i64: 1, 1>}, {transform_indices = @transform_5, window_bounds = array<i64: 2, 8, 256>}]} {
    %c0 = arith.constant 0 : index
    %c0_0 = arith.constant 0 : index
    %c0_1 = arith.constant 0 : index
    %0 = vector.load %arg1[%c0, %c0_0, %c0_1] : memref<2x8x256xf32, #tpu.memory_space<vmem>>, vector<1x8x256xf32>
    %1 = vector.shape_cast %0 : vector<1x8x256xf32> to vector<8x256xf32>
    %c1 = arith.constant 1 : index
    %c0_2 = arith.constant 0 : index
    %c0_3 = arith.constant 0 : index
    %2 = vector.load %arg1[%c1, %c0_2, %c0_3] : memref<2x8x256xf32, #tpu.memory_space<vmem>>, vector<1x8x256xf32>
    %3 = vector.shape_cast %2 : vector<1x8x256xf32> to vector<8x256xf32>
    %4 = tpu.concatenate %1, %3 in 1 : vector<8x256xf32>, vector<8x256xf32> -> vector<8x512xf32>
    %c0_4 = arith.constant 0 : index
    %c0_5 = arith.constant 0 : index
    %5 = vector.load %arg3[%c0_4, %c0_5] : memref<16x22xf32, #tpu.memory_space<vmem>>, vector<16x22xf32>
    %6 = vector.extract_strided_slice %5 {offsets = [0, 0], sizes = [16, 8], strides = [1, 1]} : vector<16x22xf32> to vector<16x8xf32>
    %7 = vector.extract_strided_slice %5 {offsets = [0, 8], sizes = [16, 1], strides = [1, 1]} : vector<16x22xf32> to vector<16x1xf32>
    %8 = vector.extract_strided_slice %5 {offsets = [0, 9], sizes = [16, 9], strides = [1, 1]} : vector<16x22xf32> to vector<16x9xf32>
    %9 = vector.extract_strided_slice %5 {offsets = [0, 18], sizes = [16, 1], strides = [1, 1]} : vector<16x22xf32> to vector<16x1xf32>
    %10 = vector.extract_strided_slice %5 {offsets = [0, 19], sizes = [16, 1], strides = [1, 1]} : vector<16x22xf32> to vector<16x1xf32>
    %11 = vector.extract_strided_slice %5 {offsets = [0, 20], sizes = [16, 1], strides = [1, 1]} : vector<16x22xf32> to vector<16x1xf32>
    %12 = vector.extract_strided_slice %5 {offsets = [0, 21], sizes = [16, 1], strides = [1, 1]} : vector<16x22xf32> to vector<16x1xf32>
    %cst = arith.constant dense<0.000000e+00> : vector<16x512xf32>
    %13 = tpu.matmul %6, %4, %cst {dimension_numbers = #tpu.dot_dimension_numbers<[1], [0], [0], [1], [0, 0, 1, 1], [], []>} : vector<16x8xf32>, vector<8x512xf32>, vector<16x512xf32> -> vector<16x512xf32>
    %14 = vector.broadcast %7 : vector<16x1xf32> to vector<16x512xf32>
    %15 = arith.addf %13, %14 : vector<16x512xf32>
    %cst_6 = arith.constant 5.000000e-01 : f32
    %16 = vector.broadcast %cst_6 : f32 to vector<16x512xf32>
    %17 = arith.mulf %16, %15 : vector<16x512xf32>
    %cst_7 = arith.constant 0.707106769 : f32
    %18 = vector.broadcast %cst_7 : f32 to vector<16x512xf32>
    %19 = arith.mulf %15, %18 : vector<16x512xf32>
    %20 = math.absf %19 : vector<16x512xf32>
    %cst_8 = arith.constant 0.327591091 : f32
    %21 = vector.broadcast %cst_8 : f32 to vector<16x512xf32>
    %22 = arith.mulf %21, %20 : vector<16x512xf32>
    %cst_9 = arith.constant 1.000000e+00 : f32
    %23 = vector.broadcast %cst_9 : f32 to vector<16x512xf32>
    %24 = arith.addf %23, %22 : vector<16x512xf32>
    %cst_10 = arith.constant 1.000000e+00 : f32
    %25 = vector.broadcast %cst_10 : f32 to vector<16x512xf32>
    %26 = arith.divf %25, %24 : vector<16x512xf32>
    %cst_11 = arith.constant 1.06140542 : f32
    %27 = vector.broadcast %cst_11 : f32 to vector<16x512xf32>
    %28 = arith.mulf %26, %27 : vector<16x512xf32>
    %cst_12 = arith.constant -1.45315206 : f32
    %29 = vector.broadcast %cst_12 : f32 to vector<16x512xf32>
    %30 = arith.addf %29, %28 : vector<16x512xf32>
    %31 = arith.mulf %26, %30 : vector<16x512xf32>
    %cst_13 = arith.constant 1.42141378 : f32
    %32 = vector.broadcast %cst_13 : f32 to vector<16x512xf32>
    %33 = arith.addf %32, %31 : vector<16x512xf32>
    %34 = arith.mulf %26, %33 : vector<16x512xf32>
    %cst_14 = arith.constant -0.284496725 : f32
    %35 = vector.broadcast %cst_14 : f32 to vector<16x512xf32>
    %36 = arith.addf %35, %34 : vector<16x512xf32>
    %37 = arith.mulf %26, %36 : vector<16x512xf32>
    %cst_15 = arith.constant 0.254829586 : f32
    %38 = vector.broadcast %cst_15 : f32 to vector<16x512xf32>
    %39 = arith.addf %38, %37 : vector<16x512xf32>
    %40 = arith.mulf %26, %39 : vector<16x512xf32>
    %cst_16 = arith.constant 0.000000e+00 : f32
    %41 = vector.broadcast %cst_16 : f32 to vector<16x512xf32>
    %42 = arith.subf %41, %20 : vector<16x512xf32>
    %43 = arith.mulf %42, %20 : vector<16x512xf32>
    %44 = math.exp %43 : vector<16x512xf32>
    %45 = arith.mulf %40, %44 : vector<16x512xf32>
    %cst_17 = arith.constant 1.000000e+00 : f32
    %46 = vector.broadcast %cst_17 : f32 to vector<16x512xf32>
    %47 = arith.subf %46, %45 : vector<16x512xf32>
    %cst_18 = arith.constant 0.000000e+00 : f32
    %48 = vector.broadcast %cst_18 : f32 to vector<16x512xf32>
    %49 = arith.cmpf olt, %19, %48 : vector<16x512xf32>
    %cst_19 = arith.constant 0.000000e+00 : f32
    %50 = vector.broadcast %cst_19 : f32 to vector<16x512xf32>
    %51 = arith.subf %50, %47 : vector<16x512xf32>
    %52 = arith.select %49, %51, %47 : vector<16x512xi1>, vector<16x512xf32>
    %cst_20 = arith.constant 1.000000e+00 : f32
    %53 = vector.broadcast %cst_20 : f32 to vector<16x512xf32>
    %54 = arith.addf %53, %52 : vector<16x512xf32>
    %55 = arith.mulf %17, %54 : vector<16x512xf32>
    %56 = vector.extract_strided_slice %8 {offsets = [0, 4], sizes = [16, 1], strides = [1, 1]} : vector<16x9xf32> to vector<16x1xf32>
    %57 = vector.broadcast %56 : vector<16x1xf32> to vector<16x512xf32>
    %58 = arith.mulf %55, %57 : vector<16x512xf32>
    %c17_i32 = arith.constant 17 : i32
    %59 = tpu.dynamic_rotate %55 by %c17_i32 dim 1 : vector<16x512xf32>, i32 -> vector<16x512xf32>
    %c0_21 = arith.constant 0 : index
    %c0_22 = arith.constant 0 : index
    %60 = vector.load %arg2[%c0_21, %c0_22] : memref<9x512xf32, #tpu.memory_space<vmem>>, vector<1x512xf32>
    %61 = vector.broadcast %60 : vector<1x512xf32> to vector<16x512xf32>
    %62 = arith.mulf %59, %61 : vector<16x512xf32>
    %63 = vector.extract_strided_slice %8 {offsets = [0, 0], sizes = [16, 1], strides = [1, 1]} : vector<16x9xf32> to vector<16x1xf32>
    %64 = vector.broadcast %63 : vector<16x1xf32> to vector<16x512xf32>
    %65 = arith.mulf %62, %64 : vector<16x512xf32>
    %66 = arith.addf %58, %65 : vector<16x512xf32>
    %c16_i32 = arith.constant 16 : i32
    %67 = tpu.dynamic_rotate %55 by %c16_i32 dim 1 : vector<16x512xf32>, i32 -> vector<16x512xf32>
    %c1_23 = arith.constant 1 : index
    %c0_24 = arith.constant 0 : index
    %68 = vector.load %arg2[%c1_23, %c0_24] : memref<9x512xf32, #tpu.memory_space<vmem>>, vector<1x512xf32>
    %69 = vector.broadcast %68 : vector<1x512xf32> to vector<16x512xf32>
    %70 = arith.mulf %67, %69 : vector<16x512xf32>
    %71 = vector.extract_strided_slice %8 {offsets = [0, 1], sizes = [16, 1], strides = [1, 1]} : vector<16x9xf32> to vector<16x1xf32>
    %72 = vector.broadcast %71 : vector<16x1xf32> to vector<16x512xf32>
    %73 = arith.mulf %70, %72 : vector<16x512xf32>
    %74 = arith.addf %66, %73 : vector<16x512xf32>
    %c15_i32 = arith.constant 15 : i32
    %75 = tpu.dynamic_rotate %55 by %c15_i32 dim 1 : vector<16x512xf32>, i32 -> vector<16x512xf32>
    %c2 = arith.constant 2 : index
    %c0_25 = arith.constant 0 : index
    %76 = vector.load %arg2[%c2, %c0_25] : memref<9x512xf32, #tpu.memory_space<vmem>>, vector<1x512xf32>
    %77 = vector.broadcast %76 : vector<1x512xf32> to vector<16x512xf32>
    %78 = arith.mulf %75, %77 : vector<16x512xf32>
    %79 = vector.extract_strided_slice %8 {offsets = [0, 2], sizes = [16, 1], strides = [1, 1]} : vector<16x9xf32> to vector<16x1xf32>
    %80 = vector.broadcast %79 : vector<16x1xf32> to vector<16x512xf32>
    %81 = arith.mulf %78, %80 : vector<16x512xf32>
    %82 = arith.addf %74, %81 : vector<16x512xf32>
    %c1_i32 = arith.constant 1 : i32
    %83 = tpu.dynamic_rotate %55 by %c1_i32 dim 1 : vector<16x512xf32>, i32 -> vector<16x512xf32>
    %c3 = arith.constant 3 : index
    %c0_26 = arith.constant 0 : index
    %84 = vector.load %arg2[%c3, %c0_26] : memref<9x512xf32, #tpu.memory_space<vmem>>, vector<1x512xf32>
    %85 = vector.broadcast %84 : vector<1x512xf32> to vector<16x512xf32>
    %86 = arith.mulf %83, %85 : vector<16x512xf32>
    %87 = vector.extract_strided_slice %8 {offsets = [0, 3], sizes = [16, 1], strides = [1, 1]} : vector<16x9xf32> to vector<16x1xf32>
    %88 = vector.broadcast %87 : vector<16x1xf32> to vector<16x512xf32>
    %89 = arith.mulf %86, %88 : vector<16x512xf32>
    %90 = arith.addf %82, %89 : vector<16x512xf32>
    %c511_i32 = arith.constant 511 : i32
    %91 = tpu.dynamic_rotate %55 by %c511_i32 dim 1 : vector<16x512xf32>, i32 -> vector<16x512xf32>
    %c5 = arith.constant 5 : index
    %c0_27 = arith.constant 0 : index
    %92 = vector.load %arg2[%c5, %c0_27] : memref<9x512xf32, #tpu.memory_space<vmem>>, vector<1x512xf32>
    %93 = vector.broadcast %92 : vector<1x512xf32> to vector<16x512xf32>
    %94 = arith.mulf %91, %93 : vector<16x512xf32>
    %95 = vector.extract_strided_slice %8 {offsets = [0, 5], sizes = [16, 1], strides = [1, 1]} : vector<16x9xf32> to vector<16x1xf32>
    %96 = vector.broadcast %95 : vector<16x1xf32> to vector<16x512xf32>
    %97 = arith.mulf %94, %96 : vector<16x512xf32>
    %98 = arith.addf %90, %97 : vector<16x512xf32>
    %c497_i32 = arith.constant 497 : i32
    %99 = tpu.dynamic_rotate %55 by %c497_i32 dim 1 : vector<16x512xf32>, i32 -> vector<16x512xf32>
    %c6 = arith.constant 6 : index
    %c0_28 = arith.constant 0 : index
    %100 = vector.load %arg2[%c6, %c0_28] : memref<9x512xf32, #tpu.memory_space<vmem>>, vector<1x512xf32>
    %101 = vector.broadcast %100 : vector<1x512xf32> to vector<16x512xf32>
    %102 = arith.mulf %99, %101 : vector<16x512xf32>
    %103 = vector.extract_strided_slice %8 {offsets = [0, 6], sizes = [16, 1], strides = [1, 1]} : vector<16x9xf32> to vector<16x1xf32>
    %104 = vector.broadcast %103 : vector<16x1xf32> to vector<16x512xf32>
    %105 = arith.mulf %102, %104 : vector<16x512xf32>
    %106 = arith.addf %98, %105 : vector<16x512xf32>
    %c496_i32 = arith.constant 496 : i32
    %107 = tpu.dynamic_rotate %55 by %c496_i32 dim 1 : vector<16x512xf32>, i32 -> vector<16x512xf32>
    %c7 = arith.constant 7 : index
    %c0_29 = arith.constant 0 : index
    %108 = vector.load %arg2[%c7, %c0_29] : memref<9x512xf32, #tpu.memory_space<vmem>>, vector<1x512xf32>
    %109 = vector.broadcast %108 : vector<1x512xf32> to vector<16x512xf32>
    %110 = arith.mulf %107, %109 : vector<16x512xf32>
    %111 = vector.extract_strided_slice %8 {offsets = [0, 7], sizes = [16, 1], strides = [1, 1]} : vector<16x9xf32> to vector<16x1xf32>
    %112 = vector.broadcast %111 : vector<16x1xf32> to vector<16x512xf32>
    %113 = arith.mulf %110, %112 : vector<16x512xf32>
    %114 = arith.addf %106, %113 : vector<16x512xf32>
    %c495_i32 = arith.constant 495 : i32
    %115 = tpu.dynamic_rotate %55 by %c495_i32 dim 1 : vector<16x512xf32>, i32 -> vector<16x512xf32>
    %c8 = arith.constant 8 : index
    %c0_30 = arith.constant 0 : index
    %116 = vector.load %arg2[%c8, %c0_30] : memref<9x512xf32, #tpu.memory_space<vmem>>, vector<1x512xf32>
    %117 = vector.broadcast %116 : vector<1x512xf32> to vector<16x512xf32>
    %118 = arith.mulf %115, %117 : vector<16x512xf32>
    %119 = vector.extract_strided_slice %8 {offsets = [0, 8], sizes = [16, 1], strides = [1, 1]} : vector<16x9xf32> to vector<16x1xf32>
    %120 = vector.broadcast %119 : vector<16x1xf32> to vector<16x512xf32>
    %121 = arith.mulf %118, %120 : vector<16x512xf32>
    %122 = arith.addf %114, %121 : vector<16x512xf32>
    %123 = vector.broadcast %9 : vector<16x1xf32> to vector<16x512xf32>
    %124 = arith.addf %122, %123 : vector<16x512xf32>
    %cst_31 = arith.constant 5.000000e-01 : f32
    %125 = vector.broadcast %cst_31 : f32 to vector<16x512xf32>
    %126 = arith.mulf %125, %124 : vector<16x512xf32>
    %cst_32 = arith.constant 0.707106769 : f32
    %127 = vector.broadcast %cst_32 : f32 to vector<16x512xf32>
    %128 = arith.mulf %124, %127 : vector<16x512xf32>
    %129 = math.absf %128 : vector<16x512xf32>
    %cst_33 = arith.constant 0.327591091 : f32
    %130 = vector.broadcast %cst_33 : f32 to vector<16x512xf32>
    %131 = arith.mulf %130, %129 : vector<16x512xf32>
    %cst_34 = arith.constant 1.000000e+00 : f32
    %132 = vector.broadcast %cst_34 : f32 to vector<16x512xf32>
    %133 = arith.addf %132, %131 : vector<16x512xf32>
    %cst_35 = arith.constant 1.000000e+00 : f32
    %134 = vector.broadcast %cst_35 : f32 to vector<16x512xf32>
    %135 = arith.divf %134, %133 : vector<16x512xf32>
    %cst_36 = arith.constant 1.06140542 : f32
    %136 = vector.broadcast %cst_36 : f32 to vector<16x512xf32>
    %137 = arith.mulf %135, %136 : vector<16x512xf32>
    %cst_37 = arith.constant -1.45315206 : f32
    %138 = vector.broadcast %cst_37 : f32 to vector<16x512xf32>
    %139 = arith.addf %138, %137 : vector<16x512xf32>
    %140 = arith.mulf %135, %139 : vector<16x512xf32>
    %cst_38 = arith.constant 1.42141378 : f32
    %141 = vector.broadcast %cst_38 : f32 to vector<16x512xf32>
    %142 = arith.addf %141, %140 : vector<16x512xf32>
    %143 = arith.mulf %135, %142 : vector<16x512xf32>
    %cst_39 = arith.constant -0.284496725 : f32
    %144 = vector.broadcast %cst_39 : f32 to vector<16x512xf32>
    %145 = arith.addf %144, %143 : vector<16x512xf32>
    %146 = arith.mulf %135, %145 : vector<16x512xf32>
    %cst_40 = arith.constant 0.254829586 : f32
    %147 = vector.broadcast %cst_40 : f32 to vector<16x512xf32>
    %148 = arith.addf %147, %146 : vector<16x512xf32>
    %149 = arith.mulf %135, %148 : vector<16x512xf32>
    %cst_41 = arith.constant 0.000000e+00 : f32
    %150 = vector.broadcast %cst_41 : f32 to vector<16x512xf32>
    %151 = arith.subf %150, %129 : vector<16x512xf32>
    %152 = arith.mulf %151, %129 : vector<16x512xf32>
    %153 = math.exp %152 : vector<16x512xf32>
    %154 = arith.mulf %149, %153 : vector<16x512xf32>
    %cst_42 = arith.constant 1.000000e+00 : f32
    %155 = vector.broadcast %cst_42 : f32 to vector<16x512xf32>
    %156 = arith.subf %155, %154 : vector<16x512xf32>
    %cst_43 = arith.constant 0.000000e+00 : f32
    %157 = vector.broadcast %cst_43 : f32 to vector<16x512xf32>
    %158 = arith.cmpf olt, %128, %157 : vector<16x512xf32>
    %cst_44 = arith.constant 0.000000e+00 : f32
    %159 = vector.broadcast %cst_44 : f32 to vector<16x512xf32>
    %160 = arith.subf %159, %156 : vector<16x512xf32>
    %161 = arith.select %158, %160, %156 : vector<16x512xi1>, vector<16x512xf32>
    %cst_45 = arith.constant 1.000000e+00 : f32
    %162 = vector.broadcast %cst_45 : f32 to vector<16x512xf32>
    %163 = arith.addf %162, %161 : vector<16x512xf32>
    %164 = arith.mulf %126, %163 : vector<16x512xf32>
    %c0_46 = arith.constant 0 : index
    %c0_47 = arith.constant 0 : index
    %165 = vector.load %arg5[%c0_46, %c0_47] : memref<1x1xf32, #tpu.memory_space<vmem>>, vector<1x1xf32>
    %166 = vector.extract_strided_slice %164 {offsets = [0, 0], sizes = [16, 256], strides = [1, 1]} : vector<16x512xf32> to vector<16x256xf32>
    %cst_48 = arith.constant dense<0.000000e+00> : vector<16xf32>
    %167 = vector.multi_reduction <add>, %166, %cst_48 [1] : vector<16x256xf32> to vector<16xf32>
    %168 = vector.shape_cast %167 : vector<16xf32> to vector<16x1xf32>
    %cst_49 = arith.constant 3.906250e-03 : f32
    %169 = vector.broadcast %cst_49 : f32 to vector<16x1xf32>
    %170 = arith.mulf %168, %169 : vector<16x1xf32>
    %171 = arith.mulf %10, %170 : vector<16x1xf32>
    %cst_50 = arith.constant dense<0.000000e+00> : vector<1xf32>
    %172 = vector.multi_reduction <add>, %171, %cst_50 [0] : vector<16x1xf32> to vector<1xf32>
    %173 = vector.shape_cast %172 : vector<1xf32> to vector<1x1xf32>
    %174 = arith.addf %173, %165 : vector<1x1xf32>
    %cst_51 = arith.constant 0.000000e+00 : f32
    %175 = vector.broadcast %cst_51 : f32 to vector<1x1xf32>
    %176 = arith.subf %175, %174 : vector<1x1xf32>
    %177 = math.exp %176 : vector<1x1xf32>
    %cst_52 = arith.constant 1.000000e+00 : f32
    %178 = vector.broadcast %cst_52 : f32 to vector<1x1xf32>
    %179 = arith.addf %178, %177 : vector<1x1xf32>
    %cst_53 = arith.constant 1.000000e+00 : f32
    %180 = vector.broadcast %cst_53 : f32 to vector<1x1xf32>
    %181 = arith.divf %180, %179 : vector<1x1xf32>
    %182 = arith.mulf %174, %181 : vector<1x1xf32>
    %183 = vector.broadcast %182 : vector<1x1xf32> to vector<16x1xf32>
    %184 = arith.mulf %11, %183 : vector<16x1xf32>
    %cst_54 = arith.constant dense<0.000000e+00> : vector<16xf32>
    %185 = vector.multi_reduction <add>, %184, %cst_54 [1] : vector<16x1xf32> to vector<16xf32>
    %186 = vector.shape_cast %185 : vector<16xf32> to vector<16x1xf32>
    %187 = arith.addf %186, %12 : vector<16x1xf32>
    %cst_55 = arith.constant 0.000000e+00 : f32
    %188 = vector.broadcast %cst_55 : f32 to vector<16x1xf32>
    %189 = arith.subf %188, %187 : vector<16x1xf32>
    %190 = math.exp %189 : vector<16x1xf32>
    %cst_56 = arith.constant 1.000000e+00 : f32
    %191 = vector.broadcast %cst_56 : f32 to vector<16x1xf32>
    %192 = arith.addf %191, %190 : vector<16x1xf32>
    %cst_57 = arith.constant 1.000000e+00 : f32
    %193 = vector.broadcast %cst_57 : f32 to vector<16x1xf32>
    %194 = arith.divf %193, %192 : vector<16x1xf32>
    %195 = vector.broadcast %194 : vector<16x1xf32> to vector<16x256xf32>
    %196 = arith.mulf %166, %195 : vector<16x256xf32>
    %197 = vector.extract_strided_slice %164 {offsets = [0, 256], sizes = [16, 256], strides = [1, 1]} : vector<16x512xf32> to vector<16x256xf32>
    %cst_58 = arith.constant dense<0.000000e+00> : vector<16xf32>
    %198 = vector.multi_reduction <add>, %197, %cst_58 [1] : vector<16x256xf32> to vector<16xf32>
    %199 = vector.shape_cast %198 : vector<16xf32> to vector<16x1xf32>
    %cst_59 = arith.constant 3.906250e-03 : f32
    %200 = vector.broadcast %cst_59 : f32 to vector<16x1xf32>
    %201 = arith.mulf %199, %200 : vector<16x1xf32>
    %202 = arith.mulf %10, %201 : vector<16x1xf32>
    %cst_60 = arith.constant dense<0.000000e+00> : vector<1xf32>
    %203 = vector.multi_reduction <add>, %202, %cst_60 [0] : vector<16x1xf32> to vector<1xf32>
    %204 = vector.shape_cast %203 : vector<1xf32> to vector<1x1xf32>
    %205 = arith.addf %204, %165 : vector<1x1xf32>
    %cst_61 = arith.constant 0.000000e+00 : f32
    %206 = vector.broadcast %cst_61 : f32 to vector<1x1xf32>
    %207 = arith.subf %206, %205 : vector<1x1xf32>
    %208 = math.exp %207 : vector<1x1xf32>
    %cst_62 = arith.constant 1.000000e+00 : f32
    %209 = vector.broadcast %cst_62 : f32 to vector<1x1xf32>
    %210 = arith.addf %209, %208 : vector<1x1xf32>
    %cst_63 = arith.constant 1.000000e+00 : f32
    %211 = vector.broadcast %cst_63 : f32 to vector<1x1xf32>
    %212 = arith.divf %211, %210 : vector<1x1xf32>
    %213 = arith.mulf %205, %212 : vector<1x1xf32>
    %214 = vector.broadcast %213 : vector<1x1xf32> to vector<16x1xf32>
    %215 = arith.mulf %11, %214 : vector<16x1xf32>
    %cst_64 = arith.constant dense<0.000000e+00> : vector<16xf32>
    %216 = vector.multi_reduction <add>, %215, %cst_64 [1] : vector<16x1xf32> to vector<16xf32>
    %217 = vector.shape_cast %216 : vector<16xf32> to vector<16x1xf32>
    %218 = arith.addf %217, %12 : vector<16x1xf32>
    %cst_65 = arith.constant 0.000000e+00 : f32
    %219 = vector.broadcast %cst_65 : f32 to vector<16x1xf32>
    %220 = arith.subf %219, %218 : vector<16x1xf32>
    %221 = math.exp %220 : vector<16x1xf32>
    %cst_66 = arith.constant 1.000000e+00 : f32
    %222 = vector.broadcast %cst_66 : f32 to vector<16x1xf32>
    %223 = arith.addf %222, %221 : vector<16x1xf32>
    %cst_67 = arith.constant 1.000000e+00 : f32
    %224 = vector.broadcast %cst_67 : f32 to vector<16x1xf32>
    %225 = arith.divf %224, %223 : vector<16x1xf32>
    %226 = vector.broadcast %225 : vector<16x1xf32> to vector<16x256xf32>
    %227 = arith.mulf %197, %226 : vector<16x256xf32>
    %228 = tpu.concatenate %196, %227 in 1 : vector<16x256xf32>, vector<16x256xf32> -> vector<16x512xf32>
    %229 = tpu.concatenate %228, %4 in 0 : vector<16x512xf32>, vector<8x512xf32> -> vector<24x512xf32>
    %c0_68 = arith.constant 0 : index
    %c0_69 = arith.constant 0 : index
    %230 = vector.load %arg4[%c0_68, %c0_69] : memref<8x25xf32, #tpu.memory_space<vmem>>, vector<8x24xf32>
    %c0_70 = arith.constant 0 : index
    %c24 = arith.constant 24 : index
    %231 = vector.load %arg4[%c0_70, %c24] : memref<8x25xf32, #tpu.memory_space<vmem>>, vector<8x1xf32>
    %cst_71 = arith.constant dense<0.000000e+00> : vector<8x512xf32>
    %232 = tpu.matmul %230, %229, %cst_71 {dimension_numbers = #tpu.dot_dimension_numbers<[1], [0], [0], [1], [0, 0, 1, 1], [], []>} : vector<8x24xf32>, vector<24x512xf32>, vector<8x512xf32> -> vector<8x512xf32>
    %233 = vector.broadcast %231 : vector<8x1xf32> to vector<8x512xf32>
    %234 = arith.addf %232, %233 : vector<8x512xf32>
    %235 = vector.extract_strided_slice %234 {offsets = [0, 0], sizes = [8, 256], strides = [1, 1]} : vector<8x512xf32> to vector<8x256xf32>
    %c0_72 = arith.constant 0 : index
    %c0_73 = arith.constant 0 : index
    %c0_74 = arith.constant 0 : index
    %236 = vector.load %arg6[%c0_72, %c0_73, %c0_74] : memref<2x8x256xf32, #tpu.memory_space<vmem>>, vector<1x8x256xf32>
    %237 = vector.shape_cast %236 : vector<1x8x256xf32> to vector<8x256xf32>
    %238 = vector.shape_cast %235 : vector<8x256xf32> to vector<1x8x256xf32>
    tpu.vector_store %arg6[%c0_72, %c0_73, %c0_74], %238 {strides = array<i32>} : memref<2x8x256xf32, #tpu.memory_space<vmem>>, vector<1x8x256xf32>,
    %239 = vector.extract_strided_slice %234 {offsets = [0, 256], sizes = [8, 256], strides = [1, 1]} : vector<8x512xf32> to vector<8x256xf32>
    %c1_75 = arith.constant 1 : index
    %c0_76 = arith.constant 0 : index
    %c0_77 = arith.constant 0 : index
    %240 = vector.load %arg6[%c1_75, %c0_76, %c0_77] : memref<2x8x256xf32, #tpu.memory_space<vmem>>, vector<1x8x256xf32>
    %241 = vector.shape_cast %240 : vector<1x8x256xf32> to vector<8x256xf32>
    %242 = vector.shape_cast %239 : vector<8x256xf32> to vector<1x8x256xf32>
    tpu.vector_store %arg6[%c1_75, %c0_76, %c0_77], %242 {strides = array<i32>} : memref<2x8x256xf32, #tpu.memory_space<vmem>>, vector<1x8x256xf32>,
    return
  }
  func.func @transform_0(%arg0: i32) -> (i32, i32, i32) {
    %c0_i32 = arith.constant 0 : i32
    %c0_i32_0 = arith.constant 0 : i32
    %c0_i32_1 = arith.constant 0 : i32
    return %arg0, %c0_i32, %c0_i32_0 : i32, i32, i32
  }
  func.func @transform_1(%arg0: i32) -> (i32, i32) {
    %c0_i32 = arith.constant 0 : i32
    %c0_i32_0 = arith.constant 0 : i32
    %c0_i32_1 = arith.constant 0 : i32
    return %c0_i32, %c0_i32_0 : i32, i32
  }
  func.func @transform_2(%arg0: i32) -> (i32, i32) {
    %c0_i32 = arith.constant 0 : i32
    %c0_i32_0 = arith.constant 0 : i32
    %c0_i32_1 = arith.constant 0 : i32
    return %c0_i32, %c0_i32_0 : i32, i32
  }
  func.func @transform_3(%arg0: i32) -> (i32, i32) {
    %c0_i32 = arith.constant 0 : i32
    %c0_i32_0 = arith.constant 0 : i32
    %c0_i32_1 = arith.constant 0 : i32
    return %c0_i32, %c0_i32_0 : i32, i32
  }
  func.func @transform_4(%arg0: i32) -> (i32, i32) {
    %c0_i32 = arith.constant 0 : i32
    %c0_i32_0 = arith.constant 0 : i32
    %c0_i32_1 = arith.constant 0 : i32
    return %c0_i32, %c0_i32_0 : i32, i32
  }
  func.func @transform_5(%arg0: i32) -> (i32, i32, i32) {
    %c0_i32 = arith.constant 0 : i32
    %c0_i32_0 = arith.constant 0 : i32
    %c0_i32_1 = arith.constant 0 : i32
    return %arg0, %c0_i32, %c0_i32_0 : i32, i32, i32
  }
}

</mosaic_0001>

<llo_original>
// kernel: tpu_custom_call.1
$region0: #{tpu_custom_call.1}
  #allocation0 [shape = 'u32[]', space=smem, size = 0x4, offset = 0x4, fixed_abs, tag = 'smem constant byte address 0x4 - core index']
  #allocation1 [shape = 'u32[144,128]{1,0:T(1,128)}', space=vmem, size = 0x12000, scoped, tag = 'internal scratch']
  #allocation2 [shape = 'f32[1,1]{1,0:T(1,128)S(1)}', space=vmem, size = 0x200, scoped, tag = 'scoped memory for tpu_custom_call.1']
  %s0 = inlined_call_operand.hbm [shape: f32[2,8,256], index: 0, kind: input, shape index: {}]
  %s1 = inlined_call_operand.hbm [shape: f32[9,512], index: 1, kind: input, shape index: {}]
  %s2 = inlined_call_operand.hbm [shape: f32[16,22], index: 2, kind: input, shape index: {}]
  %s3 = inlined_call_operand.hbm [shape: f32[8,25], index: 3, kind: input, shape index: {}]
  %s4 = inlined_call_operand.<no memory space> [shape: f32[1,1], index: 4, kind: input, shape index: {}]
  %s5 = inlined_call_operand.hbm [shape: f32[2,8,256], index: 5, kind: output, shape index: {}]
  %s6 = sld [smem:[#allocation0]]
  $region46: #{tpu_custom_call.1} parent=0
    _
  %s8 = ssub.s32 1, %s6
  %s9 = scalar_select 0, %s8, %s6
  %v10 = vstv %s4
  %11 = vst [vmem:[#allocation2] sm:$0x1] %v10
  $region1: #{tpu_custom_call.1} parent=0
    #allocation3 [shape = 'u8[16384]{0}', space=vmem, size = 0x4000, scoped, tag = 'input window, operand 0, single buffered']
    #allocation4 [shape = 's32[1]{0}', space=sflag, size = 0x4, scoped, tag = 'scoped memory for tpu_custom_call.1']
    #allocation5 [shape = 's32[1]{0}', space=sflag, size = 0x4, scoped, tag = 'scoped memory for tpu_custom_call.1']
    #allocation6 [shape = 'u8[32768]{0}', space=vmem, size = 0x8000, scoped, tag = 'input window, operand 1, single buffered']
    #allocation7 [shape = 's32[1]{0}', space=sflag, size = 0x4, scoped, tag = 'scoped memory for tpu_custom_call.1']
    #allocation8 [shape = 'u8[8192]{0}', space=vmem, size = 0x2000, scoped, tag = 'input window, operand 2, single buffered']
    #allocation9 [shape = 'u8[4096]{0}', space=vmem, size = 0x1000, scoped, tag = 'input window, operand 3, single buffered']
    #allocation10 [shape = 's32[1]{0}', space=sflag, size = 0x4, scoped, tag = 'scoped memory for tpu_custom_call.1']
    #allocation11 [shape = 'u8[16384]{0}', space=vmem, size = 0x4000, scoped, tag = 'output window, operand 0, single buffered']
    %12 = vsyncpa [#allocation4], 0
    %13 = vsyncpa [#allocation7], 0
    %14 = vsyncpa [#allocation10], 0
    %15 = vsyncpa [#allocation5], 0
    // Predicated region
    $region2: #{tpu_custom_call.1} parent=1 // pred_check
      _
    $region3: #{tpu_custom_call.1} parent=1 // pred_check_branch
      %17 = sbr.rel (0) target = $region5
    $region4: #{tpu_custom_call.1} parent=1 // pred_region
      %s19 = ssub.s32 512, 512
      %20 = vsyncadd [#allocation4], %s19
      %s21 = sshll.u32 [#allocation3], 4
      %s22 = int_to_ptr.vmem [resolvable:$true] %s21
      %27 = dma.hbm_to_vmem [thread:$0]  %s0, 512, %s22, [#allocation4], 256, 256, 16
    $region5: #{tpu_custom_call.1} parent=1 // pred_fallthru
      _
    // Predicated region
    $region6: #{tpu_custom_call.1} parent=1 // pred_check
      _
    $region7: #{tpu_custom_call.1} parent=1 // pred_check_branch
      %29 = sbr.rel (0) target = $region9
    $region8: #{tpu_custom_call.1} parent=1 // pred_region
      %s31 = ssub.s32 1024, 1024
      %32 = vsyncadd [#allocation7], %s31
      %s33 = sshll.u32 [#allocation6], 4
      %s34 = int_to_ptr.vmem [resolvable:$true] %s33
      %39 = dma.hbm_to_vmem [thread:$0]  %s1, 1024, %s34, [#allocation7], 512, 512, 32
    $region9: #{tpu_custom_call.1} parent=1 // pred_fallthru
      _
    // Predicated region
    $region10: #{tpu_custom_call.1} parent=1 // pred_check
      _
    $region11: #{tpu_custom_call.1} parent=1 // pred_check_branch
      %41 = sbr.rel (0) target = $region13
    $region12: #{tpu_custom_call.1} parent=1 // pred_region
      %s43 = ssub.s32 256, 256
      %44 = vsyncadd [#allocation7], %s43
      %s45 = sshll.u32 [#allocation8], 4
      %s46 = int_to_ptr.vmem [resolvable:$true] %s45
      %51 = dma.hbm_to_vmem [thread:$0]  %s2, 256, %s46, [#allocation7], 128, 128, 8
    $region13: #{tpu_custom_call.1} parent=1 // pred_fallthru
      _
    // Predicated region
    $region14: #{tpu_custom_call.1} parent=1 // pred_check
      _
    $region15: #{tpu_custom_call.1} parent=1 // pred_check_branch
      %53 = sbr.rel (0) target = $region17
    $region16: #{tpu_custom_call.1} parent=1 // pred_region
      %s55 = ssub.s32 128, 128
      %56 = vsyncadd [#allocation10], %s55
      %s58 = sshll.u32 [#allocation9], 4
      %s59 = int_to_ptr.vmem [resolvable:$true] %s58
      %61 = dma.hbm_to_vmem [thread:$0]  %s3, 128, %s59, [#allocation10]
    $region17: #{tpu_custom_call.1} parent=1 // pred_fallthru
      _
    // Predicated region
    $region18: #{tpu_custom_call.1} parent=1 // pred_check
      _
    $region19: #{tpu_custom_call.1} parent=1 // pred_check_branch
      %63 = sbr.rel (0) target = $region21
    $region20: #{tpu_custom_call.1} parent=1 // pred_region
      _
    $region21: #{tpu_custom_call.1} parent=1 // pred_fallthru
      _
    // Predicated region
    $region22: #{tpu_custom_call.1} parent=1 // pred_check
      _
    $region23: #{tpu_custom_call.1} parent=1 // pred_check_branch
      %65 = sbr.rel (0) target = $region25
    $region24: #{tpu_custom_call.1} parent=1 // pred_region
      %66 = dma.done [#allocation4], 512
    $region25: #{tpu_custom_call.1} parent=1 // pred_fallthru
      _
    // Predicated region
    $region26: #{tpu_custom_call.1} parent=1 // pred_check
      _
    $region27: #{tpu_custom_call.1} parent=1 // pred_check_branch
      %68 = sbr.rel (0) target = $region29
    $region28: #{tpu_custom_call.1} parent=1 // pred_region
      %69 = dma.done [#allocation7], 1024
    $region29: #{tpu_custom_call.1} parent=1 // pred_fallthru
      _
    // Predicated region
    $region30: #{tpu_custom_call.1} parent=1 // pred_check
      _
    $region31: #{tpu_custom_call.1} parent=1 // pred_check_branch
      %71 = sbr.rel (0) target = $region33
    $region32: #{tpu_custom_call.1} parent=1 // pred_region
      %72 = dma.done [#allocation7], 256
    $region33: #{tpu_custom_call.1} parent=1 // pred_fallthru
      _
    // Predicated region
    $region34: #{tpu_custom_call.1} parent=1 // pred_check
      _
    $region35: #{tpu_custom_call.1} parent=1 // pred_check_branch
      %74 = sbr.rel (0) target = $region37
    $region36: #{tpu_custom_call.1} parent=1 // pred_region
      %75 = dma.done [#allocation10], 128
    $region37: #{tpu_custom_call.1} parent=1 // pred_fallthru
      _
    %v76 = vld [vmem:[#allocation3] sm:$0xff]
    %v77 = vld [vmem:[#allocation3 + $0x8] sm:$0xff]
    %s78 = scalar_lea.vmem [#allocation3], 16
    %v79 = vld [vmem:[%s78] sm:$0xff]
    %v80 = vld [vmem:[%s78 + $0x8] sm:$0xff]
    %v81 = vld [vmem:[#allocation8] sm:$0xff]
    %v82 = vld [vmem:[#allocation8 + $0x8] sm:$0xff]
    %84 = vset.pattern.permute.xlu0 8
    %85 = vperm.xlu0 %84, %v81
    %v86 = vpop.permute.xlu0 %85
    %89 = vset.pattern.permute.xlu0 8
    %90 = vperm.xlu0 %89, %v82
    %v91 = vpop.permute.xlu0 %90
    %vm93 = vcmask 64512
    %v94 = vsel %vm93, %v81, 0
    %v96 = vsel %vm93, %v82, 0
    %98 = vmatprep.subr.mxu0 0.0
    %99 = vmatpush1.msra.mxu0 0.0
    %100 = vmatprep.subr.mxu0 0.0
    %101 = vmatpush1.msra.mxu0 0.0
    %102 = vmatprep.subr.mxu0 0.0
    %103 = vmatpush1.msra.mxu0 0.0
    %104 = vmatprep.subr.mxu0 0.0
    %105 = vmatpush1.msra.mxu0 0.0
    %106 = vmatprep.subr.mxu0 0.0
    %107 = vmatpush1.msra.mxu0 0.0
    %108 = vmatprep.subr.mxu0 0.0
    %109 = vmatpush1.msra.mxu0 0.0
    %110 = vmatprep.subr.mxu0 0.0
    %111 = vmatpush1.msra.mxu0 0.0
    %112 = vmatprep.subr.mxu0 0.0
    %113 = vmatpush1.msra.mxu0 0.0
    %114 = vmatprep.subr.mxu0 0.0
    %115 = vmatpush1.msra.mxu0 0.0
    %116 = vmatprep.subr.mxu0 0.0
    %117 = vmatpush1.msra.mxu0 0.0
    %118 = vmatprep.subr.mxu0 0.0
    %119 = vmatpush1.msra.mxu0 0.0
    %120 = vmatprep.subr.mxu0 0.0
    %121 = vmatpush1.msra.mxu0 0.0
    %122 = vmatprep.subr.mxu0 0.0
    %123 = vmatpush1.msra.mxu0 0.0
    %124 = vmatprep.subr.mxu0 0.0
    %125 = vmatpush1.msra.mxu0 0.0
    %126 = vmatprep.subr.mxu0 0.0
    %127 = vmatpush1.msra.mxu0 0.0
    %128 = vmatprep.subr.mxu0 %v77
    %129 = vmatpush1.msra.mxu0 %v76
    %130 = vmatprep.subr.mxu0 0.0
    %131 = vmatpush2.msra.mxu0 0.0
    %132 = vmatprep.subr.mxu0 0.0
    %133 = vmatpush2.msra.mxu0 0.0
    %134 = vmatprep.subr.mxu0 0.0
    %135 = vmatpush2.msra.mxu0 0.0
    %136 = vmatprep.subr.mxu0 0.0
    %137 = vmatpush2.msra.mxu0 0.0
    %138 = vmatprep.subr.mxu0 0.0
    %139 = vmatpush2.msra.mxu0 0.0
    %140 = vmatprep.subr.mxu0 0.0
    %141 = vmatpush2.msra.mxu0 0.0
    %142 = vmatprep.subr.mxu0 0.0
    %143 = vmatpush2.msra.mxu0 0.0
    %144 = vmatprep.subr.mxu0 0.0
    %145 = vmatpush2.msra.mxu0 0.0
    %146 = vmatprep.subr.mxu0 0.0
    %147 = vmatpush2.msra.mxu0 0.0
    %148 = vmatprep.subr.mxu0 0.0
    %149 = vmatpush2.msra.mxu0 0.0
    %150 = vmatprep.subr.mxu0 0.0
    %151 = vmatpush2.msra.mxu0 0.0
    %152 = vmatprep.subr.mxu0 0.0
    %153 = vmatpush2.msra.mxu0 0.0
    %154 = vmatprep.subr.mxu0 0.0
    %155 = vmatpush2.msra.mxu0 0.0
    %156 = vmatprep.subr.mxu0 0.0
    %157 = vmatpush2.msra.mxu0 0.0
    %158 = vmatprep.subr.mxu0 0.0
    %159 = vmatpush2.msra.mxu0 0.0
    %160 = vmatprep.subr.mxu0 0.0
    %161 = vmatpush2.msra.mxu0 0.0
    %162 = vmatprep.mubr.f32.mxu0 0.0
    %163 = vmatmul.mubr.f32.gmra.mxu0 %v94
    %v164 = vpop.f32.mrf.mxu0
    %v165 = vadd.f32 %v86, %v164
    %v166 = vpop.f32.mrf.mxu0
    %v167 = vadd.f32 %v86, %v166
    %168 = vmatprep.mubr.f32.mxu0 0.0
    %169 = vmatmul.mubr.f32.gmra.mxu0 %v96
    %v170 = vpop.f32.mrf.mxu0
    %v171 = vadd.f32 %v91, %v170
    %v172 = vpop.f32.mrf.mxu0
    %v173 = vadd.f32 %v91, %v172
    %174 = vdwg.mxu0
    %175 = vmatprep.subr.mxu0 0.0
    %176 = vmatpush1.msra.mxu0 0.0
    %177 = vmatprep.subr.mxu0 0.0
    %178 = vmatpush1.msra.mxu0 0.0
    %179 = vmatprep.subr.mxu0 0.0
    %180 = vmatpush1.msra.mxu0 0.0
    %181 = vmatprep.subr.mxu0 0.0
    %182 = vmatpush1.msra.mxu0 0.0
    %183 = vmatprep.subr.mxu0 0.0
    %184 = vmatpush1.msra.mxu0 0.0
    %185 = vmatprep.subr.mxu0 0.0
    %186 = vmatpush1.msra.mxu0 0.0
    %187 = vmatprep.subr.mxu0 0.0
    %188 = vmatpush1.msra.mxu0 0.0
    %189 = vmatprep.subr.mxu0 0.0
    %190 = vmatpush1.msra.mxu0 0.0
    %191 = vmatprep.subr.mxu0 0.0
    %192 = vmatpush1.msra.mxu0 0.0
    %193 = vmatprep.subr.mxu0 0.0
    %194 = vmatpush1.msra.mxu0 0.0
    %195 = vmatprep.subr.mxu0 0.0
    %196 = vmatpush1.msra.mxu0 0.0
    %197 = vmatprep.subr.mxu0 0.0
    %198 = vmatpush1.msra.mxu0 0.0
    %199 = vmatprep.subr.mxu0 0.0
    %200 = vmatpush1.msra.mxu0 0.0
    %201 = vmatprep.subr.mxu0 0.0
    %202 = vmatpush1.msra.mxu0 0.0
    %203 = vmatprep.subr.mxu0 0.0
    %204 = vmatpush1.msra.mxu0 0.0
    %205 = vmatprep.subr.mxu0 %v80
    %206 = vmatpush1.msra.mxu0 %v79
    %207 = vmatprep.subr.mxu0 0.0
    %208 = vmatpush2.msra.mxu0 0.0
    %209 = vmatprep.subr.mxu0 0.0
    %210 = vmatpush2.msra.mxu0 0.0
    %211 = vmatprep.subr.mxu0 0.0
    %212 = vmatpush2.msra.mxu0 0.0
    %213 = vmatprep.subr.mxu0 0.0
    %214 = vmatpush2.msra.mxu0 0.0
    %215 = vmatprep.subr.mxu0 0.0
    %216 = vmatpush2.msra.mxu0 0.0
    %217 = vmatprep.subr.mxu0 0.0
    %218 = vmatpush2.msra.mxu0 0.0
    %219 = vmatprep.subr.mxu0 0.0
    %220 = vmatpush2.msra.mxu0 0.0
    %221 = vmatprep.subr.mxu0 0.0
    %222 = vmatpush2.msra.mxu0 0.0
    %223 = vmatprep.subr.mxu0 0.0
    %224 = vmatpush2.msra.mxu0 0.0
    %225 = vmatprep.subr.mxu0 0.0
    %226 = vmatpush2.msra.mxu0 0.0
    %227 = vmatprep.subr.mxu0 0.0
    %228 = vmatpush2.msra.mxu0 0.0
    %229 = vmatprep.subr.mxu0 0.0
    %230 = vmatpush2.msra.mxu0 0.0
    %231 = vmatprep.subr.mxu0 0.0
    %232 = vmatpush2.msra.mxu0 0.0
    %233 = vmatprep.subr.mxu0 0.0
    %234 = vmatpush2.msra.mxu0 0.0
    %235 = vmatprep.subr.mxu0 0.0
    %236 = vmatpush2.msra.mxu0 0.0
    %237 = vmatprep.subr.mxu0 0.0
    %238 = vmatpush2.msra.mxu0 0.0
    %239 = vmatprep.mubr.f32.mxu0 0.0
    %240 = vmatmul.mubr.f32.gmra.mxu0 %v94
    %v241 = vpop.f32.mrf.mxu0
    %v242 = vadd.f32 %v86, %v241
    %v243 = vpop.f32.mrf.mxu0
    %v244 = vadd.f32 %v86, %v243
    %245 = vmatprep.mubr.f32.mxu0 0.0
    %246 = vmatmul.mubr.f32.gmra.mxu0 %v96
    %v247 = vpop.f32.mrf.mxu0
    %v248 = vadd.f32 %v91, %v247
    %v249 = vpop.f32.mrf.mxu0
    %v250 = vadd.f32 %v91, %v249
    %251 = vdwg.mxu0
    %v252 = vmul.f32 %v165, 0.5
    %v253 = vmul.f32 %v167, 0.5
    %v254 = vmul.f32 %v242, 0.5
    %v255 = vmul.f32 %v244, 0.5
    %v256 = vmul.f32 %v171, 0.5
    %v257 = vmul.f32 %v173, 0.5
    %v258 = vmul.f32 %v248, 0.5
    %v259 = vmul.f32 %v250, 0.5
    %v260 = vmul.f32 %v165, 0.70710677
    %v261 = vmul.f32 %v167, 0.70710677
    %v262 = vmul.f32 %v242, 0.70710677
    %v263 = vmul.f32 %v244, 0.70710677
    %v264 = vmul.f32 %v171, 0.70710677
    %v265 = vmul.f32 %v173, 0.70710677
    %v266 = vmul.f32 %v248, 0.70710677
    %v267 = vmul.f32 %v250, 0.70710677
    %v268 = vand.u32 2147483647, %v260
    %v269 = vand.u32 2147483647, %v261
    %v270 = vand.u32 2147483647, %v262
    %v271 = vand.u32 2147483647, %v263
    %v272 = vand.u32 2147483647, %v264
    %v273 = vand.u32 2147483647, %v265
    %v274 = vand.u32 2147483647, %v266
    %v275 = vand.u32 2147483647, %v267
    %v276 = vmul.f32 %v268, 0.3275911
    %v277 = vmul.f32 %v269, 0.3275911
    %v278 = vmul.f32 %v270, 0.3275911
    %v279 = vmul.f32 %v271, 0.3275911
    %v280 = vmul.f32 %v272, 0.3275911
    %v281 = vmul.f32 %v273, 0.3275911
    %v282 = vmul.f32 %v274, 0.3275911
    %v283 = vmul.f32 %v275, 0.3275911
    %v284 = vadd.f32 %v276, 1.0
    %v285 = vadd.f32 %v277, 1.0
    %v286 = vadd.f32 %v278, 1.0
    %v287 = vadd.f32 %v279, 1.0
    %v288 = vadd.f32 %v280, 1.0
    %v289 = vadd.f32 %v281, 1.0
    %v290 = vadd.f32 %v282, 1.0
    %v291 = vadd.f32 %v283, 1.0
    %v292 = vrcp.pop %v284
    %v293 = vmul.f32 1.0, %v292
    %v294 = vrcp.pop %v285
    %v295 = vmul.f32 1.0, %v294
    %v296 = vrcp.pop %v286
    %v297 = vmul.f32 1.0, %v296
    %v298 = vrcp.pop %v287
    %v299 = vmul.f32 1.0, %v298
    %v300 = vrcp.pop %v288
    %v301 = vmul.f32 1.0, %v300
    %v302 = vrcp.pop %v289
    %v303 = vmul.f32 1.0, %v302
    %v304 = vrcp.pop %v290
    %v305 = vmul.f32 1.0, %v304
    %v306 = vrcp.pop %v291
    %v307 = vmul.f32 1.0, %v306
    %v308 = vmul.f32 %v293, 1.0614054
    %v309 = vmul.f32 %v295, 1.0614054
    %v310 = vmul.f32 %v297, 1.0614054
    %v311 = vmul.f32 %v299, 1.0614054
    %v312 = vmul.f32 %v301, 1.0614054
    %v313 = vmul.f32 %v303, 1.0614054
    %v314 = vmul.f32 %v305, 1.0614054
    %v315 = vmul.f32 %v307, 1.0614054
    %v316 = vadd.f32 %v308, -1.4531521
    %v317 = vadd.f32 %v309, -1.4531521
    %v318 = vadd.f32 %v310, -1.4531521
    %v319 = vadd.f32 %v311, -1.4531521
    %v320 = vadd.f32 %v312, -1.4531521
    %v321 = vadd.f32 %v313, -1.4531521
    %v322 = vadd.f32 %v314, -1.4531521
    %v323 = vadd.f32 %v315, -1.4531521
    %v324 = vmul.f32 %v293, %v316
    %v325 = vmul.f32 %v295, %v317
    %v326 = vmul.f32 %v297, %v318
    %v327 = vmul.f32 %v299, %v319
    %v328 = vmul.f32 %v301, %v320
    %v329 = vmul.f32 %v303, %v321
    %v330 = vmul.f32 %v305, %v322
    %v331 = vmul.f32 %v307, %v323
    %v332 = vadd.f32 %v324, 1.4214138
    %v333 = vadd.f32 %v325, 1.4214138
    %v334 = vadd.f32 %v326, 1.4214138
    %v335 = vadd.f32 %v327, 1.4214138
    %v336 = vadd.f32 %v328, 1.4214138
    %v337 = vadd.f32 %v329, 1.4214138
    %v338 = vadd.f32 %v330, 1.4214138
    %v339 = vadd.f32 %v331, 1.4214138
    %v340 = vmul.f32 %v293, %v332
    %v341 = vmul.f32 %v295, %v333
    %v342 = vmul.f32 %v297, %v334
    %v343 = vmul.f32 %v299, %v335
    %v344 = vmul.f32 %v301, %v336
    %v345 = vmul.f32 %v303, %v337
    %v346 = vmul.f32 %v305, %v338
    %v347 = vmul.f32 %v307, %v339
    %v348 = vadd.f32 %v340, -0.28449672
    %v349 = vadd.f32 %v341, -0.28449672
    %v350 = vadd.f32 %v342, -0.28449672
    %v351 = vadd.f32 %v343, -0.28449672
    %v352 = vadd.f32 %v344, -0.28449672
    %v353 = vadd.f32 %v345, -0.28449672
    %v354 = vadd.f32 %v346, -0.28449672
    %v355 = vadd.f32 %v347, -0.28449672
    %v356 = vmul.f32 %v293, %v348
    %v357 = vmul.f32 %v295, %v349
    %v358 = vmul.f32 %v297, %v350
    %v359 = vmul.f32 %v299, %v351
    %v360 = vmul.f32 %v301, %v352
    %v361 = vmul.f32 %v303, %v353
    %v362 = vmul.f32 %v305, %v354
    %v363 = vmul.f32 %v307, %v355
    %v364 = vadd.f32 %v356, 0.2548296
    %v365 = vadd.f32 %v357, 0.2548296
    %v366 = vadd.f32 %v358, 0.2548296
    %v367 = vadd.f32 %v359, 0.2548296
    %v368 = vadd.f32 %v360, 0.2548296
    %v369 = vadd.f32 %v361, 0.2548296
    %v370 = vadd.f32 %v362, 0.2548296
    %v371 = vadd.f32 %v363, 0.2548296
    %v372 = vmul.f32 %v293, %v364
    %v373 = vmul.f32 %v295, %v365
    %v374 = vmul.f32 %v297, %v366
    %v375 = vmul.f32 %v299, %v367
    %v376 = vmul.f32 %v301, %v368
    %v377 = vmul.f32 %v303, %v369
    %v378 = vmul.f32 %v305, %v370
    %v379 = vmul.f32 %v307, %v371
    %v380 = vsub.f32 0.0, %v268
    %v381 = vsub.f32 0.0, %v269
    %v382 = vsub.f32 0.0, %v270
    %v383 = vsub.f32 0.0, %v271
    %v384 = vsub.f32 0.0, %v272
    %v385 = vsub.f32 0.0, %v273
    %v386 = vsub.f32 0.0, %v274
    %v387 = vsub.f32 0.0, %v275
    %v388 = vmul.f32 %v380, %v268
    %v389 = vmul.f32 %v381, %v269
    %v390 = vmul.f32 %v382, %v270
    %v391 = vmul.f32 %v383, %v271
    %v392 = vmul.f32 %v384, %v272
    %v393 = vmul.f32 %v385, %v273
    %v394 = vmul.f32 %v386, %v274
    %v395 = vmul.f32 %v387, %v275
    %v396 = vmul.f32 %v388, 1.442695
    %v397 = vpow.pop %v396
    %v398 = vmul.f32 %v389, 1.442695
    %v399 = vpow.pop %v398
    %v400 = vmul.f32 %v390, 1.442695
    %v401 = vpow.pop %v400
    %v402 = vmul.f32 %v391, 1.442695
    %v403 = vpow.pop %v402
    %v404 = vmul.f32 %v392, 1.442695
    %v405 = vpow.pop %v404
    %v406 = vmul.f32 %v393, 1.442695
    %v407 = vpow.pop %v406
    %v408 = vmul.f32 %v394, 1.442695
    %v409 = vpow.pop %v408
    %v410 = vmul.f32 %v395, 1.442695
    %v411 = vpow.pop %v410
    %v412 = vmul.f32 %v372, %v397
    %v413 = vmul.f32 %v373, %v399
    %v414 = vmul.f32 %v374, %v401
    %v415 = vmul.f32 %v375, %v403
    %v416 = vmul.f32 %v376, %v405
    %v417 = vmul.f32 %v377, %v407
    %v418 = vmul.f32 %v378, %v409
    %v419 = vmul.f32 %v379, %v411
    %v420 = vsub.f32 1.0, %v412
    %v421 = vsub.f32 1.0, %v413
    %v422 = vsub.f32 1.0, %v414
    %v423 = vsub.f32 1.0, %v415
    %v424 = vsub.f32 1.0, %v416
    %v425 = vsub.f32 1.0, %v417
    %v426 = vsub.f32 1.0, %v418
    %v427 = vsub.f32 1.0, %v419
    %vm428 = vcmp.lt.f32.partialorder %v260, 0.0
    %vm429 = vcmp.lt.f32.partialorder %v261, 0.0
    %vm430 = vcmp.lt.f32.partialorder %v262, 0.0
    %vm431 = vcmp.lt.f32.partialorder %v263, 0.0
    %vm432 = vcmp.lt.f32.partialorder %v264, 0.0
    %vm433 = vcmp.lt.f32.partialorder %v265, 0.0
    %vm434 = vcmp.lt.f32.partialorder %v266, 0.0
    %vm435 = vcmp.lt.f32.partialorder %v267, 0.0
    %v436 = vsub.f32 0.0, %v420
    %v437 = vsub.f32 0.0, %v421
    %v438 = vsub.f32 0.0, %v422
    %v439 = vsub.f32 0.0, %v423
    %v440 = vsub.f32 0.0, %v424
    %v441 = vsub.f32 0.0, %v425
    %v442 = vsub.f32 0.0, %v426
    %v443 = vsub.f32 0.0, %v427
    %v444 = vsel %vm428, %v436, %v420
    %v445 = vsel %vm429, %v437, %v421
    %v446 = vsel %vm430, %v438, %v422
    %v447 = vsel %vm431, %v439, %v423
    %v448 = vsel %vm432, %v440, %v424
    %v449 = vsel %vm433, %v441, %v425
    %v450 = vsel %vm434, %v442, %v426
    %v451 = vsel %vm435, %v443, %v427
    %v452 = vadd.f32 %v444, 1.0
    %v453 = vadd.f32 %v445, 1.0
    %v454 = vadd.f32 %v446, 1.0
    %v455 = vadd.f32 %v447, 1.0
    %v456 = vadd.f32 %v448, 1.0
    %v457 = vadd.f32 %v449, 1.0
    %v458 = vadd.f32 %v450, 1.0
    %v459 = vadd.f32 %v451, 1.0
    %v460 = vmul.f32 %v252, %v452
    %v461 = vmul.f32 %v253, %v453
    %v462 = vmul.f32 %v254, %v454
    %v463 = vmul.f32 %v255, %v455
    %v464 = vmul.f32 %v256, %v456
    %v465 = vmul.f32 %v257, %v457
    %v466 = vmul.f32 %v258, %v458
    %v467 = vmul.f32 %v259, %v459
    %468 = vset.pattern.permute.xlu0 13
    %469 = vperm.xlu0 %468, %v81
    %v470 = vpop.permute.xlu0 %469
    %472 = vset.pattern.permute.xlu0 13
    %473 = vperm.xlu0 %472, %v82
    %v474 = vpop.permute.xlu0 %473
    %v476 = vmul.f32 %v460, %v470
    %v477 = vmul.f32 %v461, %v470
    %v478 = vmul.f32 %v462, %v470
    %v479 = vmul.f32 %v463, %v470
    %v480 = vmul.f32 %v464, %v474
    %v481 = vmul.f32 %v465, %v474
    %v482 = vmul.f32 %v466, %v474
    %v483 = vmul.f32 %v467, %v474
    %484 = vrot.lane.b32.xlu0 %v460, 17
    %v485 = vpop.permute.xlu0 %484
    %486 = vrot.lane.b32.xlu0 %v464, 17
    %v487 = vpop.permute.xlu0 %486
    %488 = vrot.lane.b32.xlu0 %v461, 17
    %v489 = vpop.permute.xlu0 %488
    %490 = vrot.lane.b32.xlu0 %v465, 17
    %v491 = vpop.permute.xlu0 %490
    %492 = vrot.lane.b32.xlu0 %v462, 17
    %v493 = vpop.permute.xlu0 %492
    %494 = vrot.lane.b32.xlu0 %v466, 17
    %v495 = vpop.permute.xlu0 %494
    %496 = vrot.lane.b32.xlu0 %v463, 17
    %v497 = vpop.permute.xlu0 %496
    %498 = vrot.lane.b32.xlu0 %v467, 17
    %v499 = vpop.permute.xlu0 %498
    %v500 = vlaneseq
    %v501 = vand.u32 %v500, 127
    %vm502 = vcmp.lt.s32.totalorder %v501, 17
    %v503 = vsel %vm502, %v493, %v497
    %v504 = vsel %vm502, %v495, %v499
    %v505 = vsel %vm502, %v489, %v493
    %v506 = vsel %vm502, %v491, %v495
    %v507 = vsel %vm502, %v485, %v489
    %v508 = vsel %vm502, %v487, %v491
    %v509 = vsel %vm502, %v497, %v485
    %v510 = vsel %vm502, %v499, %v487
    %v511 = vld [vmem:[#allocation6] ss:$8 sm:$0xf]
    %v513 = vlaneseq
    %v514 = vshrl.u32 %v513, 7
    %v515 = vsub.s32 0, %v514
    %v516 = vrot.slane %v511, %v515
    %v517 = vlaneseq
    %v518 = vshrl.u32 %v517, 7
    %v519 = vsub.s32 1, %v518
    %v520 = vrot.slane %v511, %v519
    %v521 = vlaneseq
    %v522 = vshrl.u32 %v521, 7
    %v523 = vsub.s32 2, %v522
    %v524 = vrot.slane %v511, %v523
    %v525 = vlaneseq
    %v526 = vshrl.u32 %v525, 7
    %v527 = vsub.s32 3, %v526
    %v528 = vrot.slane %v511, %v527
    %v533 = vmul.f32 %v509, %v516
    %v534 = vmul.f32 %v507, %v520
    %v535 = vmul.f32 %v505, %v524
    %v536 = vmul.f32 %v503, %v528
    %v537 = vmul.f32 %v510, %v516
    %v538 = vmul.f32 %v508, %v520
    %v539 = vmul.f32 %v506, %v524
    %v540 = vmul.f32 %v504, %v528
    %541 = vset.pattern.permute.xlu0 9
    %542 = vperm.xlu0 %541, %v81
    %v543 = vpop.permute.xlu0 %542
    %545 = vset.pattern.permute.xlu0 9
    %546 = vperm.xlu0 %545, %v82
    %v547 = vpop.permute.xlu0 %546
    %v549 = vmul.f32 %v533, %v543
    %v550 = vmul.f32 %v534, %v543
    %v551 = vmul.f32 %v535, %v543
    %v552 = vmul.f32 %v536, %v543
    %v553 = vmul.f32 %v537, %v547
    %v554 = vmul.f32 %v538, %v547
    %v555 = vmul.f32 %v539, %v547
    %v556 = vmul.f32 %v540, %v547
    %v557 = vadd.f32 %v476, %v549
    %v558 = vadd.f32 %v477, %v550
    %v559 = vadd.f32 %v478, %v551
    %v560 = vadd.f32 %v479, %v552
    %v561 = vadd.f32 %v480, %v553
    %v562 = vadd.f32 %v481, %v554
    %v563 = vadd.f32 %v482, %v555
    %v564 = vadd.f32 %v483, %v556
    %565 = vrot.lane.b32.xlu0 %v460, 16
    %v566 = vpop.permute.xlu0 %565
    %567 = vrot.lane.b32.xlu0 %v464, 16
    %v568 = vpop.permute.xlu0 %567
    %569 = vrot.lane.b32.xlu0 %v461, 16
    %v570 = vpop.permute.xlu0 %569
    %571 = vrot.lane.b32.xlu0 %v465, 16
    %v572 = vpop.permute.xlu0 %571
    %573 = vrot.lane.b32.xlu0 %v462, 16
    %v574 = vpop.permute.xlu0 %573
    %575 = vrot.lane.b32.xlu0 %v466, 16
    %v576 = vpop.permute.xlu0 %575
    %577 = vrot.lane.b32.xlu0 %v463, 16
    %v578 = vpop.permute.xlu0 %577
    %579 = vrot.lane.b32.xlu0 %v467, 16
    %v580 = vpop.permute.xlu0 %579
    %vm581 = vcmp.lt.s32.totalorder %v501, 16
    %v582 = vsel %vm581, %v574, %v578
    %v583 = vsel %vm581, %v576, %v580
    %v584 = vsel %vm581, %v570, %v574
    %v585 = vsel %vm581, %v572, %v576
    %v586 = vsel %vm581, %v566, %v570
    %v587 = vsel %vm581, %v568, %v572
    %v588 = vsel %vm581, %v578, %v566
    %v589 = vsel %vm581, %v580, %v568
    %s590 = scalar_lea.vmem [#allocation6], 1
    %v591 = vld [vmem:[%s590] ss:$8 sm:$0xf]
    %v593 = vlaneseq
    %v594 = vshrl.u32 %v593, 7
    %v595 = vsub.s32 0, %v594
    %v596 = vrot.slane %v591, %v595
    %v597 = vlaneseq
    %v598 = vshrl.u32 %v597, 7
    %v599 = vsub.s32 1, %v598
    %v600 = vrot.slane %v591, %v599
    %v601 = vlaneseq
    %v602 = vshrl.u32 %v601, 7
    %v603 = vsub.s32 2, %v602
    %v604 = vrot.slane %v591, %v603
    %v605 = vlaneseq
    %v606 = vshrl.u32 %v605, 7
    %v607 = vsub.s32 3, %v606
    %v608 = vrot.slane %v591, %v607
    %v613 = vmul.f32 %v588, %v596
    %v614 = vmul.f32 %v586, %v600
    %v615 = vmul.f32 %v584, %v604
    %v616 = vmul.f32 %v582, %v608
    %v617 = vmul.f32 %v589, %v596
    %v618 = vmul.f32 %v587, %v600
    %v619 = vmul.f32 %v585, %v604
    %v620 = vmul.f32 %v583, %v608
    %621 = vset.pattern.permute.xlu0 10
    %622 = vperm.xlu0 %621, %v81
    %v623 = vpop.permute.xlu0 %622
    %625 = vset.pattern.permute.xlu0 10
    %626 = vperm.xlu0 %625, %v82
    %v627 = vpop.permute.xlu0 %626
    %v629 = vmul.f32 %v613, %v623
    %v630 = vmul.f32 %v614, %v623
    %v631 = vmul.f32 %v615, %v623
    %v632 = vmul.f32 %v616, %v623
    %v633 = vmul.f32 %v617, %v627
    %v634 = vmul.f32 %v618, %v627
    %v635 = vmul.f32 %v619, %v627
    %v636 = vmul.f32 %v620, %v627
    %v637 = vadd.f32 %v557, %v629
    %v638 = vadd.f32 %v558, %v630
    %v639 = vadd.f32 %v559, %v631
    %v640 = vadd.f32 %v560, %v632
    %v641 = vadd.f32 %v561, %v633
    %v642 = vadd.f32 %v562, %v634
    %v643 = vadd.f32 %v563, %v635
    %v644 = vadd.f32 %v564, %v636
    %645 = vrot.lane.b32.xlu0 %v460, 15
    %v646 = vpop.permute.xlu0 %645
    %647 = vrot.lane.b32.xlu0 %v464, 15
    %v648 = vpop.permute.xlu0 %647
    %649 = vrot.lane.b32.xlu0 %v461, 15
    %v650 = vpop.permute.xlu0 %649
    %651 = vrot.lane.b32.xlu0 %v465, 15
    %v652 = vpop.permute.xlu0 %651
    %653 = vrot.lane.b32.xlu0 %v462, 15
    %v654 = vpop.permute.xlu0 %653
    %655 = vrot.lane.b32.xlu0 %v466, 15
    %v656 = vpop.permute.xlu0 %655
    %657 = vrot.lane.b32.xlu0 %v463, 15
    %v658 = vpop.permute.xlu0 %657
    %659 = vrot.lane.b32.xlu0 %v467, 15
    %v660 = vpop.permute.xlu0 %659
    %vm661 = vcmp.lt.s32.totalorder %v501, 15
    %v662 = vsel %vm661, %v654, %v658
    %v663 = vsel %vm661, %v656, %v660
    %v664 = vsel %vm661, %v650, %v654
    %v665 = vsel %vm661, %v652, %v656
    %v666 = vsel %vm661, %v646, %v650
    %v667 = vsel %vm661, %v648, %v652
    %v668 = vsel %vm661, %v658, %v646
    %v669 = vsel %vm661, %v660, %v648
    %s670 = scalar_lea.vmem [#allocation6], 2
    %v671 = vld [vmem:[%s670] ss:$8 sm:$0xf]
    %v673 = vlaneseq
    %v674 = vshrl.u32 %v673, 7
    %v675 = vsub.s32 0, %v674
    %v676 = vrot.slane %v671, %v675
    %v677 = vlaneseq
    %v678 = vshrl.u32 %v677, 7
    %v679 = vsub.s32 1, %v678
    %v680 = vrot.slane %v671, %v679
    %v681 = vlaneseq
    %v682 = vshrl.u32 %v681, 7
    %v683 = vsub.s32 2, %v682
    %v684 = vrot.slane %v671, %v683
    %v685 = vlaneseq
    %v686 = vshrl.u32 %v685, 7
    %v687 = vsub.s32 3, %v686
    %v688 = vrot.slane %v671, %v687
    %v693 = vmul.f32 %v668, %v676
    %v694 = vmul.f32 %v666, %v680
    %v695 = vmul.f32 %v664, %v684
    %v696 = vmul.f32 %v662, %v688
    %v697 = vmul.f32 %v669, %v676
    %v698 = vmul.f32 %v667, %v680
    %v699 = vmul.f32 %v665, %v684
    %v700 = vmul.f32 %v663, %v688
    %701 = vset.pattern.permute.xlu0 11
    %702 = vperm.xlu0 %701, %v81
    %v703 = vpop.permute.xlu0 %702
    %705 = vset.pattern.permute.xlu0 11
    %706 = vperm.xlu0 %705, %v82
    %v707 = vpop.permute.xlu0 %706
    %v709 = vmul.f32 %v693, %v703
    %v710 = vmul.f32 %v694, %v703
    %v711 = vmul.f32 %v695, %v703
    %v712 = vmul.f32 %v696, %v703
    %v713 = vmul.f32 %v697, %v707
    %v714 = vmul.f32 %v698, %v707
    %v715 = vmul.f32 %v699, %v707
    %v716 = vmul.f32 %v700, %v707
    %v717 = vadd.f32 %v637, %v709
    %v718 = vadd.f32 %v638, %v710
    %v719 = vadd.f32 %v639, %v711
    %v720 = vadd.f32 %v640, %v712
    %v721 = vadd.f32 %v641, %v713
    %v722 = vadd.f32 %v642, %v714
    %v723 = vadd.f32 %v643, %v715
    %v724 = vadd.f32 %v644, %v716
    %725 = vrot.lane.b32.xlu0 %v460, 1
    %v726 = vpop.permute.xlu0 %725
    %727 = vrot.lane.b32.xlu0 %v464, 1
    %v728 = vpop.permute.xlu0 %727
    %729 = vrot.lane.b32.xlu0 %v461, 1
    %v730 = vpop.permute.xlu0 %729
    %731 = vrot.lane.b32.xlu0 %v465, 1
    %v732 = vpop.permute.xlu0 %731
    %733 = vrot.lane.b32.xlu0 %v462, 1
    %v734 = vpop.permute.xlu0 %733
    %735 = vrot.lane.b32.xlu0 %v466, 1
    %v736 = vpop.permute.xlu0 %735
    %737 = vrot.lane.b32.xlu0 %v463, 1
    %v738 = vpop.permute.xlu0 %737
    %739 = vrot.lane.b32.xlu0 %v467, 1
    %v740 = vpop.permute.xlu0 %739
    %vm741 = vcmp.lt.s32.totalorder %v501, 1
    %v742 = vsel %vm741, %v734, %v738
    %v743 = vsel %vm741, %v736, %v740
    %v744 = vsel %vm741, %v730, %v734
    %v745 = vsel %vm741, %v732, %v736
    %v746 = vsel %vm741, %v726, %v730
    %v747 = vsel %vm741, %v728, %v732
    %v748 = vsel %vm741, %v738, %v726
    %v749 = vsel %vm741, %v740, %v728
    %s750 = scalar_lea.vmem [#allocation6], 3
    %v751 = vld [vmem:[%s750] ss:$8 sm:$0xf]
    %v753 = vlaneseq
    %v754 = vshrl.u32 %v753, 7
    %v755 = vsub.s32 0, %v754
    %v756 = vrot.slane %v751, %v755
    %v757 = vlaneseq
    %v758 = vshrl.u32 %v757, 7
    %v759 = vsub.s32 1, %v758
    %v760 = vrot.slane %v751, %v759
    %v761 = vlaneseq
    %v762 = vshrl.u32 %v761, 7
    %v763 = vsub.s32 2, %v762
    %v764 = vrot.slane %v751, %v763
    %v765 = vlaneseq
    %v766 = vshrl.u32 %v765, 7
    %v767 = vsub.s32 3, %v766
    %v768 = vrot.slane %v751, %v767
    %v773 = vmul.f32 %v748, %v756
    %v774 = vmul.f32 %v746, %v760
    %v775 = vmul.f32 %v744, %v764
    %v776 = vmul.f32 %v742, %v768
    %v777 = vmul.f32 %v749, %v756
    %v778 = vmul.f32 %v747, %v760
    %v779 = vmul.f32 %v745, %v764
    %v780 = vmul.f32 %v743, %v768
    %781 = vset.pattern.permute.xlu0 12
    %782 = vperm.xlu0 %781, %v81
    %v783 = vpop.permute.xlu0 %782
    %785 = vset.pattern.permute.xlu0 12
    %786 = vperm.xlu0 %785, %v82
    %v787 = vpop.permute.xlu0 %786
    %v789 = vmul.f32 %v773, %v783
    %v790 = vmul.f32 %v774, %v783
    %v791 = vmul.f32 %v775, %v783
    %v792 = vmul.f32 %v776, %v783
    %v793 = vmul.f32 %v777, %v787
    %v794 = vmul.f32 %v778, %v787
    %v795 = vmul.f32 %v779, %v787
    %v796 = vmul.f32 %v780, %v787
    %v797 = vadd.f32 %v717, %v789
    %v798 = vadd.f32 %v718, %v790
    %v799 = vadd.f32 %v719, %v791
    %v800 = vadd.f32 %v720, %v792
    %v801 = vadd.f32 %v721, %v793
    %v802 = vadd.f32 %v722, %v794
    %v803 = vadd.f32 %v723, %v795
    %v804 = vadd.f32 %v724, %v796
    %805 = vrot.lane.b32.xlu0 %v460, 127
    %v806 = vpop.permute.xlu0 %805
    %807 = vrot.lane.b32.xlu0 %v464, 127
    %v808 = vpop.permute.xlu0 %807
    %809 = vrot.lane.b32.xlu0 %v461, 127
    %v810 = vpop.permute.xlu0 %809
    %811 = vrot.lane.b32.xlu0 %v465, 127
    %v812 = vpop.permute.xlu0 %811
    %813 = vrot.lane.b32.xlu0 %v462, 127
    %v814 = vpop.permute.xlu0 %813
    %815 = vrot.lane.b32.xlu0 %v466, 127
    %v816 = vpop.permute.xlu0 %815
    %817 = vrot.lane.b32.xlu0 %v463, 127
    %v818 = vpop.permute.xlu0 %817
    %819 = vrot.lane.b32.xlu0 %v467, 127
    %v820 = vpop.permute.xlu0 %819
    %vm821 = vcmp.lt.s32.totalorder %v501, 127
    %v822 = vsel %vm821, %v814, %v818
    %v823 = vsel %vm821, %v816, %v820
    %v824 = vsel %vm821, %v810, %v814
    %v825 = vsel %vm821, %v812, %v816
    %v826 = vsel %vm821, %v806, %v810
    %v827 = vsel %vm821, %v808, %v812
    %v828 = vsel %vm821, %v818, %v806
    %v829 = vsel %vm821, %v820, %v808
    %s830 = scalar_lea.vmem [#allocation6], 5
    %v831 = vld [vmem:[%s830] ss:$8 sm:$0xf]
    %v833 = vlaneseq
    %v834 = vshrl.u32 %v833, 7
    %v835 = vsub.s32 0, %v834
    %v836 = vrot.slane %v831, %v835
    %v837 = vlaneseq
    %v838 = vshrl.u32 %v837, 7
    %v839 = vsub.s32 1, %v838
    %v840 = vrot.slane %v831, %v839
    %v841 = vlaneseq
    %v842 = vshrl.u32 %v841, 7
    %v843 = vsub.s32 2, %v842
    %v844 = vrot.slane %v831, %v843
    %v845 = vlaneseq
    %v846 = vshrl.u32 %v845, 7
    %v847 = vsub.s32 3, %v846
    %v848 = vrot.slane %v831, %v847
    %v853 = vmul.f32 %v826, %v836
    %v854 = vmul.f32 %v824, %v840
    %v855 = vmul.f32 %v822, %v844
    %v856 = vmul.f32 %v828, %v848
    %v857 = vmul.f32 %v827, %v836
    %v858 = vmul.f32 %v825, %v840
    %v859 = vmul.f32 %v823, %v844
    %v860 = vmul.f32 %v829, %v848
    %861 = vset.pattern.permute.xlu0 14
    %862 = vperm.xlu0 %861, %v81
    %v863 = vpop.permute.xlu0 %862
    %865 = vset.pattern.permute.xlu0 14
    %866 = vperm.xlu0 %865, %v82
    %v867 = vpop.permute.xlu0 %866
    %v869 = vmul.f32 %v853, %v863
    %v870 = vmul.f32 %v854, %v863
    %v871 = vmul.f32 %v855, %v863
    %v872 = vmul.f32 %v856, %v863
    %v873 = vmul.f32 %v857, %v867
    %v874 = vmul.f32 %v858, %v867
    %v875 = vmul.f32 %v859, %v867
    %v876 = vmul.f32 %v860, %v867
    %v877 = vadd.f32 %v797, %v869
    %v878 = vadd.f32 %v798, %v870
    %v879 = vadd.f32 %v799, %v871
    %v880 = vadd.f32 %v800, %v872
    %v881 = vadd.f32 %v801, %v873
    %v882 = vadd.f32 %v802, %v874
    %v883 = vadd.f32 %v803, %v875
    %v884 = vadd.f32 %v804, %v876
    %885 = vrot.lane.b32.xlu0 %v460, 113
    %v886 = vpop.permute.xlu0 %885
    %887 = vrot.lane.b32.xlu0 %v464, 113
    %v888 = vpop.permute.xlu0 %887
    %889 = vrot.lane.b32.xlu0 %v461, 113
    %v890 = vpop.permute.xlu0 %889
    %891 = vrot.lane.b32.xlu0 %v465, 113
    %v892 = vpop.permute.xlu0 %891
    %893 = vrot.lane.b32.xlu0 %v462, 113
    %v894 = vpop.permute.xlu0 %893
    %895 = vrot.lane.b32.xlu0 %v466, 113
    %v896 = vpop.permute.xlu0 %895
    %897 = vrot.lane.b32.xlu0 %v463, 113
    %v898 = vpop.permute.xlu0 %897
    %899 = vrot.lane.b32.xlu0 %v467, 113
    %v900 = vpop.permute.xlu0 %899
    %vm901 = vcmp.lt.s32.totalorder %v501, 113
    %v902 = vsel %vm901, %v894, %v898
    %v903 = vsel %vm901, %v896, %v900
    %v904 = vsel %vm901, %v890, %v894
    %v905 = vsel %vm901, %v892, %v896
    %v906 = vsel %vm901, %v886, %v890
    %v907 = vsel %vm901, %v888, %v892
    %v908 = vsel %vm901, %v898, %v886
    %v909 = vsel %vm901, %v900, %v888
    %s910 = scalar_lea.vmem [#allocation6], 6
    %v911 = vld [vmem:[%s910] ss:$8 sm:$0xf]
    %v913 = vlaneseq
    %v914 = vshrl.u32 %v913, 7
    %v915 = vsub.s32 0, %v914
    %v916 = vrot.slane %v911, %v915
    %v917 = vlaneseq
    %v918 = vshrl.u32 %v917, 7
    %v919 = vsub.s32 1, %v918
    %v920 = vrot.slane %v911, %v919
    %v921 = vlaneseq
    %v922 = vshrl.u32 %v921, 7
    %v923 = vsub.s32 2, %v922
    %v924 = vrot.slane %v911, %v923
    %v925 = vlaneseq
    %v926 = vshrl.u32 %v925, 7
    %v927 = vsub.s32 3, %v926
    %v928 = vrot.slane %v911, %v927
    %v933 = vmul.f32 %v906, %v916
    %v934 = vmul.f32 %v904, %v920
    %v935 = vmul.f32 %v902, %v924
    %v936 = vmul.f32 %v908, %v928
    %v937 = vmul.f32 %v907, %v916
    %v938 = vmul.f32 %v905, %v920
    %v939 = vmul.f32 %v903, %v924
    %v940 = vmul.f32 %v909, %v928
    %941 = vset.pattern.permute.xlu0 15
    %942 = vperm.xlu0 %941, %v81
    %v943 = vpop.permute.xlu0 %942
    %945 = vset.pattern.permute.xlu0 15
    %946 = vperm.xlu0 %945, %v82
    %v947 = vpop.permute.xlu0 %946
    %v949 = vmul.f32 %v933, %v943
    %v950 = vmul.f32 %v934, %v943
    %v951 = vmul.f32 %v935, %v943
    %v952 = vmul.f32 %v936, %v943
    %v953 = vmul.f32 %v937, %v947
    %v954 = vmul.f32 %v938, %v947
    %v955 = vmul.f32 %v939, %v947
    %v956 = vmul.f32 %v940, %v947
    %v957 = vadd.f32 %v877, %v949
    %v958 = vadd.f32 %v878, %v950
    %v959 = vadd.f32 %v879, %v951
    %v960 = vadd.f32 %v880, %v952
    %v961 = vadd.f32 %v881, %v953
    %v962 = vadd.f32 %v882, %v954
    %v963 = vadd.f32 %v883, %v955
    %v964 = vadd.f32 %v884, %v956
    %965 = vrot.lane.b32.xlu0 %v460, 112
    %v966 = vpop.permute.xlu0 %965
    %967 = vrot.lane.b32.xlu0 %v464, 112
    %v968 = vpop.permute.xlu0 %967
    %969 = vrot.lane.b32.xlu0 %v461, 112
    %v970 = vpop.permute.xlu0 %969
    %971 = vrot.lane.b32.xlu0 %v465, 112
    %v972 = vpop.permute.xlu0 %971
    %973 = vrot.lane.b32.xlu0 %v462, 112
    %v974 = vpop.permute.xlu0 %973
    %975 = vrot.lane.b32.xlu0 %v466, 112
    %v976 = vpop.permute.xlu0 %975
    %977 = vrot.lane.b32.xlu0 %v463, 112
    %v978 = vpop.permute.xlu0 %977
    %979 = vrot.lane.b32.xlu0 %v467, 112
    %v980 = vpop.permute.xlu0 %979
    %vm981 = vcmp.lt.s32.totalorder %v501, 112
    %v982 = vsel %vm981, %v974, %v978
    %v983 = vsel %vm981, %v976, %v980
    %v984 = vsel %vm981, %v970, %v974
    %v985 = vsel %vm981, %v972, %v976
    %v986 = vsel %vm981, %v966, %v970
    %v987 = vsel %vm981, %v968, %v972
    %v988 = vsel %vm981, %v978, %v966
    %v989 = vsel %vm981, %v980, %v968
    %s990 = scalar_lea.vmem [#allocation6], 7
    %v991 = vld [vmem:[%s990] ss:$8 sm:$0xf]
    %v993 = vlaneseq
    %v994 = vshrl.u32 %v993, 7
    %v995 = vsub.s32 0, %v994
    %v996 = vrot.slane %v991, %v995
    %v997 = vlaneseq
    %v998 = vshrl.u32 %v997, 7
    %v999 = vsub.s32 1, %v998
    %v1000 = vrot.slane %v991, %v999
    %v1001 = vlaneseq
    %v1002 = vshrl.u32 %v1001, 7
    %v1003 = vsub.s32 2, %v1002
    %v1004 = vrot.slane %v991, %v1003
    %v1005 = vlaneseq
    %v1006 = vshrl.u32 %v1005, 7
    %v1007 = vsub.s32 3, %v1006
    %v1008 = vrot.slane %v991, %v1007
    %v1013 = vmul.f32 %v986, %v996
    %v1014 = vmul.f32 %v984, %v1000
    %v1015 = vmul.f32 %v982, %v1004
    %v1016 = vmul.f32 %v988, %v1008
    %v1017 = vmul.f32 %v987, %v996
    %v1018 = vmul.f32 %v985, %v1000
    %v1019 = vmul.f32 %v983, %v1004
    %v1020 = vmul.f32 %v989, %v1008
    %1021 = vset.pattern.permute.xlu0 16
    %1022 = vperm.xlu0 %1021, %v81
    %v1023 = vpop.permute.xlu0 %1022
    %1025 = vset.pattern.permute.xlu0 16
    %1026 = vperm.xlu0 %1025, %v82
    %v1027 = vpop.permute.xlu0 %1026
    %v1029 = vmul.f32 %v1013, %v1023
    %v1030 = vmul.f32 %v1014, %v1023
    %v1031 = vmul.f32 %v1015, %v1023
    %v1032 = vmul.f32 %v1016, %v1023
    %v1033 = vmul.f32 %v1017, %v1027
    %v1034 = vmul.f32 %v1018, %v1027
    %v1035 = vmul.f32 %v1019, %v1027
    %v1036 = vmul.f32 %v1020, %v1027
    %v1037 = vadd.f32 %v957, %v1029
    %v1038 = vadd.f32 %v958, %v1030
    %v1039 = vadd.f32 %v959, %v1031
    %v1040 = vadd.f32 %v960, %v1032
    %v1041 = vadd.f32 %v961, %v1033
    %v1042 = vadd.f32 %v962, %v1034
    %v1043 = vadd.f32 %v963, %v1035
    %v1044 = vadd.f32 %v964, %v1036
    %1045 = vrot.lane.b32.xlu0 %v460, 111
    %v1046 = vpop.permute.xlu0 %1045
    %1047 = vrot.lane.b32.xlu0 %v464, 111
    %v1048 = vpop.permute.xlu0 %1047
    %1049 = vrot.lane.b32.xlu0 %v461, 111
    %v1050 = vpop.permute.xlu0 %1049
    %1051 = vrot.lane.b32.xlu0 %v465, 111
    %v1052 = vpop.permute.xlu0 %1051
    %1053 = vrot.lane.b32.xlu0 %v462, 111
    %v1054 = vpop.permute.xlu0 %1053
    %1055 = vrot.lane.b32.xlu0 %v466, 111
    %v1056 = vpop.permute.xlu0 %1055
    %1057 = vrot.lane.b32.xlu0 %v463, 111
    %v1058 = vpop.permute.xlu0 %1057
    %1059 = vrot.lane.b32.xlu0 %v467, 111
    %v1060 = vpop.permute.xlu0 %1059
    %vm1061 = vcmp.lt.s32.totalorder %v501, 111
    %v1062 = vsel %vm1061, %v1054, %v1058
    %v1063 = vsel %vm1061, %v1056, %v1060
    %v1064 = vsel %vm1061, %v1050, %v1054
    %v1065 = vsel %vm1061, %v1052, %v1056
    %v1066 = vsel %vm1061, %v1046, %v1050
    %v1067 = vsel %vm1061, %v1048, %v1052
    %v1068 = vsel %vm1061, %v1058, %v1046
    %v1069 = vsel %vm1061, %v1060, %v1048
    %s1070 = scalar_lea.vmem [#allocation6], 32
    %v1071 = vld [vmem:[%s1070] ss:$8 sm:$0xf]
    %v1073 = vlaneseq
    %v1074 = vshrl.u32 %v1073, 7
    %v1075 = vsub.s32 0, %v1074
    %v1076 = vrot.slane %v1071, %v1075
    %v1077 = vlaneseq
    %v1078 = vshrl.u32 %v1077, 7
    %v1079 = vsub.s32 1, %v1078
    %v1080 = vrot.slane %v1071, %v1079
    %v1081 = vlaneseq
    %v1082 = vshrl.u32 %v1081, 7
    %v1083 = vsub.s32 2, %v1082
    %v1084 = vrot.slane %v1071, %v1083
    %v1085 = vlaneseq
    %v1086 = vshrl.u32 %v1085, 7
    %v1087 = vsub.s32 3, %v1086
    %v1088 = vrot.slane %v1071, %v1087
    %v1093 = vmul.f32 %v1066, %v1076
    %v1094 = vmul.f32 %v1064, %v1080
    %v1095 = vmul.f32 %v1062, %v1084
    %v1096 = vmul.f32 %v1068, %v1088
    %v1097 = vmul.f32 %v1067, %v1076
    %v1098 = vmul.f32 %v1065, %v1080
    %v1099 = vmul.f32 %v1063, %v1084
    %v1100 = vmul.f32 %v1069, %v1088
    %1101 = vset.pattern.permute.xlu0 17
    %1102 = vperm.xlu0 %1101, %v81
    %v1103 = vpop.permute.xlu0 %1102
    %1105 = vset.pattern.permute.xlu0 17
    %1106 = vperm.xlu0 %1105, %v82
    %v1107 = vpop.permute.xlu0 %1106
    %v1109 = vmul.f32 %v1093, %v1103
    %v1110 = vmul.f32 %v1094, %v1103
    %v1111 = vmul.f32 %v1095, %v1103
    %v1112 = vmul.f32 %v1096, %v1103
    %v1113 = vmul.f32 %v1097, %v1107
    %v1114 = vmul.f32 %v1098, %v1107
    %v1115 = vmul.f32 %v1099, %v1107
    %v1116 = vmul.f32 %v1100, %v1107
    %v1117 = vadd.f32 %v1037, %v1109
    %v1118 = vadd.f32 %v1038, %v1110
    %v1119 = vadd.f32 %v1039, %v1111
    %v1120 = vadd.f32 %v1040, %v1112
    %v1121 = vadd.f32 %v1041, %v1113
    %v1122 = vadd.f32 %v1042, %v1114
    %v1123 = vadd.f32 %v1043, %v1115
    %v1124 = vadd.f32 %v1044, %v1116
    %1125 = vset.pattern.permute.xlu0 18
    %1126 = vperm.xlu0 %1125, %v81
    %v1127 = vpop.permute.xlu0 %1126
    %1129 = vset.pattern.permute.xlu0 18
    %1130 = vperm.xlu0 %1129, %v82
    %v1131 = vpop.permute.xlu0 %1130
    %v1133 = vadd.f32 %v1117, %v1127
    %v1134 = vadd.f32 %v1118, %v1127
    %v1135 = vadd.f32 %v1119, %v1127
    %v1136 = vadd.f32 %v1120, %v1127
    %v1137 = vadd.f32 %v1121, %v1131
    %v1138 = vadd.f32 %v1122, %v1131
    %v1139 = vadd.f32 %v1123, %v1131
    %v1140 = vadd.f32 %v1124, %v1131
    %v1141 = vmul.f32 %v1133, 0.5
    %v1142 = vmul.f32 %v1134, 0.5
    %v1143 = vmul.f32 %v1135, 0.5
    %v1144 = vmul.f32 %v1136, 0.5
    %v1145 = vmul.f32 %v1137, 0.5
    %v1146 = vmul.f32 %v1138, 0.5
    %v1147 = vmul.f32 %v1139, 0.5
    %v1148 = vmul.f32 %v1140, 0.5
    %v1149 = vmul.f32 %v1133, 0.70710677
    %v1150 = vmul.f32 %v1134, 0.70710677
    %v1151 = vmul.f32 %v1135, 0.70710677
    %v1152 = vmul.f32 %v1136, 0.70710677
    %v1153 = vmul.f32 %v1137, 0.70710677
    %v1154 = vmul.f32 %v1138, 0.70710677
    %v1155 = vmul.f32 %v1139, 0.70710677
    %v1156 = vmul.f32 %v1140, 0.70710677
    %v1157 = vand.u32 2147483647, %v1149
    %v1158 = vand.u32 2147483647, %v1150
    %v1159 = vand.u32 2147483647, %v1151
    %v1160 = vand.u32 2147483647, %v1152
    %v1161 = vand.u32 2147483647, %v1153
    %v1162 = vand.u32 2147483647, %v1154
    %v1163 = vand.u32 2147483647, %v1155
    %v1164 = vand.u32 2147483647, %v1156
    %v1165 = vmul.f32 %v1157, 0.3275911
    %v1166 = vmul.f32 %v1158, 0.3275911
    %v1167 = vmul.f32 %v1159, 0.3275911
    %v1168 = vmul.f32 %v1160, 0.3275911
    %v1169 = vmul.f32 %v1161, 0.3275911
    %v1170 = vmul.f32 %v1162, 0.3275911
    %v1171 = vmul.f32 %v1163, 0.3275911
    %v1172 = vmul.f32 %v1164, 0.3275911
    %v1173 = vadd.f32 %v1165, 1.0
    %v1174 = vadd.f32 %v1166, 1.0
    %v1175 = vadd.f32 %v1167, 1.0
    %v1176 = vadd.f32 %v1168, 1.0
    %v1177 = vadd.f32 %v1169, 1.0
    %v1178 = vadd.f32 %v1170, 1.0
    %v1179 = vadd.f32 %v1171, 1.0
    %v1180 = vadd.f32 %v1172, 1.0
    %v1181 = vrcp.pop %v1173
    %v1182 = vmul.f32 1.0, %v1181
    %v1183 = vrcp.pop %v1174
    %v1184 = vmul.f32 1.0, %v1183
    %v1185 = vrcp.pop %v1175
    %v1186 = vmul.f32 1.0, %v1185
    %v1187 = vrcp.pop %v1176
    %v1188 = vmul.f32 1.0, %v1187
    %v1189 = vrcp.pop %v1177
    %v1190 = vmul.f32 1.0, %v1189
    %v1191 = vrcp.pop %v1178
    %v1192 = vmul.f32 1.0, %v1191
    %v1193 = vrcp.pop %v1179
    %v1194 = vmul.f32 1.0, %v1193
    %v1195 = vrcp.pop %v1180
    %v1196 = vmul.f32 1.0, %v1195
    %v1197 = vmul.f32 %v1182, 1.0614054
    %v1198 = vmul.f32 %v1184, 1.0614054
    %v1199 = vmul.f32 %v1186, 1.0614054
    %v1200 = vmul.f32 %v1188, 1.0614054
    %v1201 = vmul.f32 %v1190, 1.0614054
    %v1202 = vmul.f32 %v1192, 1.0614054
    %v1203 = vmul.f32 %v1194, 1.0614054
    %v1204 = vmul.f32 %v1196, 1.0614054
    %v1205 = vadd.f32 %v1197, -1.4531521
    %v1206 = vadd.f32 %v1198, -1.4531521
    %v1207 = vadd.f32 %v1199, -1.4531521
    %v1208 = vadd.f32 %v1200, -1.4531521
    %v1209 = vadd.f32 %v1201, -1.4531521
    %v1210 = vadd.f32 %v1202, -1.4531521
    %v1211 = vadd.f32 %v1203, -1.4531521
    %v1212 = vadd.f32 %v1204, -1.4531521
    %v1213 = vmul.f32 %v1182, %v1205
    %v1214 = vmul.f32 %v1184, %v1206
    %v1215 = vmul.f32 %v1186, %v1207
    %v1216 = vmul.f32 %v1188, %v1208
    %v1217 = vmul.f32 %v1190, %v1209
    %v1218 = vmul.f32 %v1192, %v1210
    %v1219 = vmul.f32 %v1194, %v1211
    %v1220 = vmul.f32 %v1196, %v1212
    %v1221 = vadd.f32 %v1213, 1.4214138
    %v1222 = vadd.f32 %v1214, 1.4214138
    %v1223 = vadd.f32 %v1215, 1.4214138
    %v1224 = vadd.f32 %v1216, 1.4214138
    %v1225 = vadd.f32 %v1217, 1.4214138
    %v1226 = vadd.f32 %v1218, 1.4214138
    %v1227 = vadd.f32 %v1219, 1.4214138
    %v1228 = vadd.f32 %v1220, 1.4214138
    %v1229 = vmul.f32 %v1182, %v1221
    %v1230 = vmul.f32 %v1184, %v1222
    %v1231 = vmul.f32 %v1186, %v1223
    %v1232 = vmul.f32 %v1188, %v1224
    %v1233 = vmul.f32 %v1190, %v1225
    %v1234 = vmul.f32 %v1192, %v1226
    %v1235 = vmul.f32 %v1194, %v1227
    %v1236 = vmul.f32 %v1196, %v1228
    %v1237 = vadd.f32 %v1229, -0.28449672
    %v1238 = vadd.f32 %v1230, -0.28449672
    %v1239 = vadd.f32 %v1231, -0.28449672
    %v1240 = vadd.f32 %v1232, -0.28449672
    %v1241 = vadd.f32 %v1233, -0.28449672
    %v1242 = vadd.f32 %v1234, -0.28449672
    %v1243 = vadd.f32 %v1235, -0.28449672
    %v1244 = vadd.f32 %v1236, -0.28449672
    %v1245 = vmul.f32 %v1182, %v1237
    %v1246 = vmul.f32 %v1184, %v1238
    %v1247 = vmul.f32 %v1186, %v1239
    %v1248 = vmul.f32 %v1188, %v1240
    %v1249 = vmul.f32 %v1190, %v1241
    %v1250 = vmul.f32 %v1192, %v1242
    %v1251 = vmul.f32 %v1194, %v1243
    %v1252 = vmul.f32 %v1196, %v1244
    %v1253 = vadd.f32 %v1245, 0.2548296
    %v1254 = vadd.f32 %v1246, 0.2548296
    %v1255 = vadd.f32 %v1247, 0.2548296
    %v1256 = vadd.f32 %v1248, 0.2548296
    %v1257 = vadd.f32 %v1249, 0.2548296
    %v1258 = vadd.f32 %v1250, 0.2548296
    %v1259 = vadd.f32 %v1251, 0.2548296
    %v1260 = vadd.f32 %v1252, 0.2548296
    %v1261 = vmul.f32 %v1182, %v1253
    %v1262 = vmul.f32 %v1184, %v1254
    %v1263 = vmul.f32 %v1186, %v1255
    %v1264 = vmul.f32 %v1188, %v1256
    %v1265 = vmul.f32 %v1190, %v1257
    %v1266 = vmul.f32 %v1192, %v1258
    %v1267 = vmul.f32 %v1194, %v1259
    %v1268 = vmul.f32 %v1196, %v1260
    %v1269 = vsub.f32 0.0, %v1157
    %v1270 = vsub.f32 0.0, %v1158
    %v1271 = vsub.f32 0.0, %v1159
    %v1272 = vsub.f32 0.0, %v1160
    %v1273 = vsub.f32 0.0, %v1161
    %v1274 = vsub.f32 0.0, %v1162
    %v1275 = vsub.f32 0.0, %v1163
    %v1276 = vsub.f32 0.0, %v1164
    %v1277 = vmul.f32 %v1269, %v1157
    %v1278 = vmul.f32 %v1270, %v1158
    %v1279 = vmul.f32 %v1271, %v1159
    %v1280 = vmul.f32 %v1272, %v1160
    %v1281 = vmul.f32 %v1273, %v1161
    %v1282 = vmul.f32 %v1274, %v1162
    %v1283 = vmul.f32 %v1275, %v1163
    %v1284 = vmul.f32 %v1276, %v1164
    %v1285 = vmul.f32 %v1277, 1.442695
    %v1286 = vpow.pop %v1285
    %v1287 = vmul.f32 %v1278, 1.442695
    %v1288 = vpow.pop %v1287
    %v1289 = vmul.f32 %v1279, 1.442695
    %v1290 = vpow.pop %v1289
    %v1291 = vmul.f32 %v1280, 1.442695
    %v1292 = vpow.pop %v1291
    %v1293 = vmul.f32 %v1281, 1.442695
    %v1294 = vpow.pop %v1293
    %v1295 = vmul.f32 %v1282, 1.442695
    %v1296 = vpow.pop %v1295
    %v1297 = vmul.f32 %v1283, 1.442695
    %v1298 = vpow.pop %v1297
    %v1299 = vmul.f32 %v1284, 1.442695
    %v1300 = vpow.pop %v1299
    %v1301 = vmul.f32 %v1261, %v1286
    %v1302 = vmul.f32 %v1262, %v1288
    %v1303 = vmul.f32 %v1263, %v1290
    %v1304 = vmul.f32 %v1264, %v1292
    %v1305 = vmul.f32 %v1265, %v1294
    %v1306 = vmul.f32 %v1266, %v1296
    %v1307 = vmul.f32 %v1267, %v1298
    %v1308 = vmul.f32 %v1268, %v1300
    %v1309 = vsub.f32 1.0, %v1301
    %v1310 = vsub.f32 1.0, %v1302
    %v1311 = vsub.f32 1.0, %v1303
    %v1312 = vsub.f32 1.0, %v1304
    %v1313 = vsub.f32 1.0, %v1305
    %v1314 = vsub.f32 1.0, %v1306
    %v1315 = vsub.f32 1.0, %v1307
    %v1316 = vsub.f32 1.0, %v1308
    %vm1317 = vcmp.lt.f32.partialorder %v1149, 0.0
    %vm1318 = vcmp.lt.f32.partialorder %v1150, 0.0
    %vm1319 = vcmp.lt.f32.partialorder %v1151, 0.0
    %vm1320 = vcmp.lt.f32.partialorder %v1152, 0.0
    %vm1321 = vcmp.lt.f32.partialorder %v1153, 0.0
    %vm1322 = vcmp.lt.f32.partialorder %v1154, 0.0
    %vm1323 = vcmp.lt.f32.partialorder %v1155, 0.0
    %vm1324 = vcmp.lt.f32.partialorder %v1156, 0.0
    %v1325 = vsub.f32 0.0, %v1309
    %v1326 = vsub.f32 0.0, %v1310
    %v1327 = vsub.f32 0.0, %v1311
    %v1328 = vsub.f32 0.0, %v1312
    %v1329 = vsub.f32 0.0, %v1313
    %v1330 = vsub.f32 0.0, %v1314
    %v1331 = vsub.f32 0.0, %v1315
    %v1332 = vsub.f32 0.0, %v1316
    %v1333 = vsel %vm1317, %v1325, %v1309
    %v1334 = vsel %vm1318, %v1326, %v1310
    %v1335 = vsel %vm1319, %v1327, %v1311
    %v1336 = vsel %vm1320, %v1328, %v1312
    %v1337 = vsel %vm1321, %v1329, %v1313
    %v1338 = vsel %vm1322, %v1330, %v1314
    %v1339 = vsel %vm1323, %v1331, %v1315
    %v1340 = vsel %vm1324, %v1332, %v1316
    %v1341 = vadd.f32 %v1333, 1.0
    %v1342 = vadd.f32 %v1334, 1.0
    %v1343 = vadd.f32 %v1335, 1.0
    %v1344 = vadd.f32 %v1336, 1.0
    %v1345 = vadd.f32 %v1337, 1.0
    %v1346 = vadd.f32 %v1338, 1.0
    %v1347 = vadd.f32 %v1339, 1.0
    %v1348 = vadd.f32 %v1340, 1.0
    %v1349 = vmul.f32 %v1141, %v1341
    %v1350 = vmul.f32 %v1142, %v1342
    %v1351 = vmul.f32 %v1143, %v1343
    %v1352 = vmul.f32 %v1144, %v1344
    %v1353 = vmul.f32 %v1145, %v1345
    %v1354 = vmul.f32 %v1146, %v1346
    %v1355 = vmul.f32 %v1147, %v1347
    %v1356 = vmul.f32 %v1148, %v1348
    %v1357 = vld [vmem:[#allocation2] sm:$0x1]
    %v1358 = vadd.f32 %v1349, %v1350
    %1359 = vadd.xlane.f32.xlu0 %v1358
    %v1360 = vpop.xlane.xlu0 %1359
    %v1361 = vadd.f32 %v1353, %v1354
    %1362 = vadd.xlane.f32.xlu0 %v1361
    %v1363 = vpop.xlane.xlu0 %1362
    %v1364 = vmul.f32 %v1360, 0.00390625
    %v1365 = vmul.f32 %v1363, 0.00390625
    %v1366 = vmul.f32 %v81, %v1364
    %v1367 = vmul.f32 %v82, %v1365
    %vm1368 = vcmask 162968
    %v1369 = vsel %vm1368, %v1366, 0.0
    %v1370 = vsel %vm1368, %v1367, 0.0
    %v1371 = vadd.f32 %v1369, %v1370
    %v1372 = vrot.slane %v1371, 4
    %v1373 = vadd.f32 %v1371, %v1372
    %v1374 = vrot.slane %v1373, 2
    %v1375 = vadd.f32 %v1373, %v1374
    %v1376 = vrot.slane %v1375, 1
    %v1377 = vadd.f32 %v1375, %v1376
    %v1379 = vlaneseq
    %v1380 = vshrl.u32 %v1379, 7
    %v1381 = vsub.s32 0, %v1380
    %v1382 = vrot.slane %v1357, %v1381
    %1383 = vrot.lane.b32.xlu0 %v1382, 19
    %v1384 = vpop.permute.xlu0 %1383
    %v1386 = vadd.f32 %v1377, %v1384
    %v1387 = vsub.f32 0.0, %v1386
    %v1388 = vmul.f32 %v1387, 1.442695
    %v1389 = vpow.pop %v1388
    %v1390 = vadd.f32 %v1389, 1.0
    %v1391 = vrcp.pop %v1390
    %v1392 = vmul.f32 1.0, %v1391
    %v1393 = vmul.f32 %v1386, %v1392
    %v1394 = vlaneseq
    %v1395 = vshrl.u32 %v1394, 7
    %v1396 = vsub.s32 0, %v1395
    %v1397 = vrot.slane %v1393, %v1396
    %1399 = vrot.lane.b32.xlu0 %v1397, 1
    %v1400 = vpop.permute.xlu0 %1399
    %v1402 = vmul.f32 %v81, %v1400
    %v1403 = vmul.f32 %v82, %v1400
    %v1404 = vadd.f32 %v1402, 0.0
    %v1405 = vadd.f32 %v1403, 0.0
    %1406 = vrot.lane.b32.xlu0 %v81, 127
    %v1407 = vpop.permute.xlu0 %1406
    %1408 = vrot.lane.b32.xlu0 %v82, 127
    %v1409 = vpop.permute.xlu0 %1408
    %v1412 = vadd.f32 %v1404, %v1407
    %v1413 = vadd.f32 %v1405, %v1409
    %v1414 = vsub.f32 0.0, %v1412
    %v1415 = vsub.f32 0.0, %v1413
    %v1416 = vmul.f32 %v1414, 1.442695
    %v1417 = vpow.pop %v1416
    %v1418 = vmul.f32 %v1415, 1.442695
    %v1419 = vpow.pop %v1418
    %v1420 = vadd.f32 %v1417, 1.0
    %v1421 = vadd.f32 %v1419, 1.0
    %v1422 = vrcp.pop %v1420
    %v1423 = vmul.f32 1.0, %v1422
    %v1424 = vrcp.pop %v1421
    %v1425 = vmul.f32 1.0, %v1424
    %1427 = vset.pattern.permute.xlu0 20
    %1428 = vperm.xlu0 %1427, %v1423
    %v1429 = vpop.permute.xlu0 %1428
    %1432 = vset.pattern.permute.xlu0 20
    %1433 = vperm.xlu0 %1432, %v1425
    %v1434 = vpop.permute.xlu0 %1433
    %v1436 = vmul.f32 %v1349, %v1429
    %v1437 = vmul.f32 %v1350, %v1429
    %v1438 = vmul.f32 %v1353, %v1434
    %v1439 = vmul.f32 %v1354, %v1434
    %v1440 = vadd.f32 %v1351, %v1352
    %1441 = vadd.xlane.f32.xlu0 %v1440
    %v1442 = vpop.xlane.xlu0 %1441
    %v1443 = vadd.f32 %v1355, %v1356
    %1444 = vadd.xlane.f32.xlu0 %v1443
    %v1445 = vpop.xlane.xlu0 %1444
    %v1446 = vmul.f32 %v1442, 0.00390625
    %v1447 = vmul.f32 %v1445, 0.00390625
    %v1448 = vmul.f32 %v81, %v1446
    %v1449 = vmul.f32 %v82, %v1447
    %v1450 = vsel %vm1368, %v1448, 0.0
    %v1451 = vsel %vm1368, %v1449, 0.0
    %v1452 = vadd.f32 %v1450, %v1451
    %v1453 = vrot.slane %v1452, 4
    %v1454 = vadd.f32 %v1452, %v1453
    %v1455 = vrot.slane %v1454, 2
    %v1456 = vadd.f32 %v1454, %v1455
    %v1457 = vrot.slane %v1456, 1
    %v1458 = vadd.f32 %v1456, %v1457
    %v1459 = vadd.f32 %v1458, %v1384
    %v1460 = vsub.f32 0.0, %v1459
    %v1461 = vmul.f32 %v1460, 1.442695
    %v1462 = vpow.pop %v1461
    %v1463 = vadd.f32 %v1462, 1.0
    %v1464 = vrcp.pop %v1463
    %v1465 = vmul.f32 1.0, %v1464
    %v1466 = vmul.f32 %v1459, %v1465
    %v1467 = vlaneseq
    %v1468 = vshrl.u32 %v1467, 7
    %v1469 = vsub.s32 0, %v1468
    %v1470 = vrot.slane %v1466, %v1469
    %1472 = vrot.lane.b32.xlu0 %v1470, 1
    %v1473 = vpop.permute.xlu0 %1472
    %v1475 = vmul.f32 %v81, %v1473
    %v1476 = vmul.f32 %v82, %v1473
    %v1477 = vadd.f32 %v1475, 0.0
    %v1478 = vadd.f32 %v1476, 0.0
    %v1479 = vadd.f32 %v1477, %v1407
    %v1480 = vadd.f32 %v1478, %v1409
    %v1481 = vsub.f32 0.0, %v1479
    %v1482 = vsub.f32 0.0, %v1480
    %v1483 = vmul.f32 %v1481, 1.442695
    %v1484 = vpow.pop %v1483
    %v1485 = vmul.f32 %v1482, 1.442695
    %v1486 = vpow.pop %v1485
    %v1487 = vadd.f32 %v1484, 1.0
    %v1488 = vadd.f32 %v1486, 1.0
    %v1489 = vrcp.pop %v1487
    %v1490 = vmul.f32 1.0, %v1489
    %v1491 = vrcp.pop %v1488
    %v1492 = vmul.f32 1.0, %v1491
    %1494 = vset.pattern.permute.xlu0 20
    %1495 = vperm.xlu0 %1494, %v1490
    %v1496 = vpop.permute.xlu0 %1495
    %1499 = vset.pattern.permute.xlu0 20
    %1500 = vperm.xlu0 %1499, %v1492
    %v1501 = vpop.permute.xlu0 %1500
    %v1503 = vmul.f32 %v1351, %v1496
    %v1504 = vmul.f32 %v1352, %v1496
    %v1505 = vmul.f32 %v1355, %v1501
    %v1506 = vmul.f32 %v1356, %v1501
    %v1507 = vld [vmem:[#allocation9] sm:$0xff]
    %1509 = vset.pattern.permute.xlu0 24
    %1510 = vperm.xlu0 %1509, %v1507
    %v1511 = vpop.permute.xlu0 %1510
    %vm1513 = vcmask 195584
    %v1514 = vsel %vm1513, %v1507, 0
    %1516 = vmatprep.subr.mxu0 0.0
    %1517 = vmatpush1.msra.mxu0 0.0
    %1518 = vmatprep.subr.mxu0 0.0
    %1519 = vmatpush1.msra.mxu0 0.0
    %1520 = vmatprep.subr.mxu0 0.0
    %1521 = vmatpush1.msra.mxu0 0.0
    %1522 = vmatprep.subr.mxu0 0.0
    %1523 = vmatpush1.msra.mxu0 0.0
    %1524 = vmatprep.subr.mxu0 0.0
    %1525 = vmatpush1.msra.mxu0 0.0
    %1526 = vmatprep.subr.mxu0 0.0
    %1527 = vmatpush1.msra.mxu0 0.0
    %1528 = vmatprep.subr.mxu0 0.0
    %1529 = vmatpush1.msra.mxu0 0.0
    %1530 = vmatprep.subr.mxu0 0.0
    %1531 = vmatpush1.msra.mxu0 0.0
    %1532 = vmatprep.subr.mxu0 0.0
    %1533 = vmatpush1.msra.mxu0 0.0
    %1534 = vmatprep.subr.mxu0 0.0
    %1535 = vmatpush1.msra.mxu0 0.0
    %1536 = vmatprep.subr.mxu0 0.0
    %1537 = vmatpush1.msra.mxu0 0.0
    %1538 = vmatprep.subr.mxu0 0.0
    %1539 = vmatpush1.msra.mxu0 0.0
    %1540 = vmatprep.subr.mxu0 0.0
    %1541 = vmatpush1.msra.mxu0 0.0
    %1542 = vmatprep.subr.mxu0 %v77
    %1543 = vmatpush1.msra.mxu0 %v76
    %1544 = vmatprep.subr.mxu0 %v1439
    %1545 = vmatpush1.msra.mxu0 %v1438
    %1546 = vmatprep.subr.mxu0 %v1437
    %1547 = vmatpush1.msra.mxu0 %v1436
    %1548 = vmatprep.subr.mxu0 0.0
    %1549 = vmatpush2.msra.mxu0 0.0
    %1550 = vmatprep.subr.mxu0 0.0
    %1551 = vmatpush2.msra.mxu0 0.0
    %1552 = vmatprep.subr.mxu0 0.0
    %1553 = vmatpush2.msra.mxu0 0.0
    %1554 = vmatprep.subr.mxu0 0.0
    %1555 = vmatpush2.msra.mxu0 0.0
    %1556 = vmatprep.subr.mxu0 0.0
    %1557 = vmatpush2.msra.mxu0 0.0
    %1558 = vmatprep.subr.mxu0 0.0
    %1559 = vmatpush2.msra.mxu0 0.0
    %1560 = vmatprep.subr.mxu0 0.0
    %1561 = vmatpush2.msra.mxu0 0.0
    %1562 = vmatprep.subr.mxu0 0.0
    %1563 = vmatpush2.msra.mxu0 0.0
    %1564 = vmatprep.subr.mxu0 0.0
    %1565 = vmatpush2.msra.mxu0 0.0
    %1566 = vmatprep.subr.mxu0 0.0
    %1567 = vmatpush2.msra.mxu0 0.0
    %1568 = vmatprep.subr.mxu0 0.0
    %1569 = vmatpush2.msra.mxu0 0.0
    %1570 = vmatprep.subr.mxu0 0.0
    %1571 = vmatpush2.msra.mxu0 0.0
    %1572 = vmatprep.subr.mxu0 0.0
    %1573 = vmatpush2.msra.mxu0 0.0
    %1574 = vmatprep.subr.mxu0 0.0
    %1575 = vmatpush2.msra.mxu0 0.0
    %1576 = vmatprep.subr.mxu0 0.0
    %1577 = vmatpush2.msra.mxu0 0.0
    %1578 = vmatprep.subr.mxu0 0.0
    %1579 = vmatpush2.msra.mxu0 0.0
    %1580 = vmatprep.mubr.f32.mxu0 0.0
    %1581 = vmatmul.mubr.f32.gmra.mxu0 %v1514
    %v1582 = vpop.f32.mrf.mxu0
    %v1583 = vadd.f32 %v1511, %v1582
    %v1584 = vpop.f32.mrf.mxu0
    %v1585 = vadd.f32 %v1511, %v1584
    %1586 = vdwg.mxu0
    %1587 = vmatprep.subr.mxu0 0.0
    %1588 = vmatpush1.msra.mxu0 0.0
    %1589 = vmatprep.subr.mxu0 0.0
    %1590 = vmatpush1.msra.mxu0 0.0
    %1591 = vmatprep.subr.mxu0 0.0
    %1592 = vmatpush1.msra.mxu0 0.0
    %1593 = vmatprep.subr.mxu0 0.0
    %1594 = vmatpush1.msra.mxu0 0.0
    %1595 = vmatprep.subr.mxu0 0.0
    %1596 = vmatpush1.msra.mxu0 0.0
    %1597 = vmatprep.subr.mxu0 0.0
    %1598 = vmatpush1.msra.mxu0 0.0
    %1599 = vmatprep.subr.mxu0 0.0
    %1600 = vmatpush1.msra.mxu0 0.0
    %1601 = vmatprep.subr.mxu0 0.0
    %1602 = vmatpush1.msra.mxu0 0.0
    %1603 = vmatprep.subr.mxu0 0.0
    %1604 = vmatpush1.msra.mxu0 0.0
    %1605 = vmatprep.subr.mxu0 0.0
    %1606 = vmatpush1.msra.mxu0 0.0
    %1607 = vmatprep.subr.mxu0 0.0
    %1608 = vmatpush1.msra.mxu0 0.0
    %1609 = vmatprep.subr.mxu0 0.0
    %1610 = vmatpush1.msra.mxu0 0.0
    %1611 = vmatprep.subr.mxu0 0.0
    %1612 = vmatpush1.msra.mxu0 0.0
    %1613 = vmatprep.subr.mxu0 %v80
    %1614 = vmatpush1.msra.mxu0 %v79
    %1615 = vmatprep.subr.mxu0 %v1506
    %1616 = vmatpush1.msra.mxu0 %v1505
    %1617 = vmatprep.subr.mxu0 %v1504
    %1618 = vmatpush1.msra.mxu0 %v1503
    %1619 = vmatprep.subr.mxu0 0.0
    %1620 = vmatpush2.msra.mxu0 0.0
    %1621 = vmatprep.subr.mxu0 0.0
    %1622 = vmatpush2.msra.mxu0 0.0
    %1623 = vmatprep.subr.mxu0 0.0
    %1624 = vmatpush2.msra.mxu0 0.0
    %1625 = vmatprep.subr.mxu0 0.0
    %1626 = vmatpush2.msra.mxu0 0.0
    %1627 = vmatprep.subr.mxu0 0.0
    %1628 = vmatpush2.msra.mxu0 0.0
    %1629 = vmatprep.subr.mxu0 0.0
    %1630 = vmatpush2.msra.mxu0 0.0
    %1631 = vmatprep.subr.mxu0 0.0
    %1632 = vmatpush2.msra.mxu0 0.0
    %1633 = vmatprep.subr.mxu0 0.0
    %1634 = vmatpush2.msra.mxu0 0.0
    %1635 = vmatprep.subr.mxu0 0.0
    %1636 = vmatpush2.msra.mxu0 0.0
    %1637 = vmatprep.subr.mxu0 0.0
    %1638 = vmatpush2.msra.mxu0 0.0
    %1639 = vmatprep.subr.mxu0 0.0
    %1640 = vmatpush2.msra.mxu0 0.0
    %1641 = vmatprep.subr.mxu0 0.0
    %1642 = vmatpush2.msra.mxu0 0.0
    %1643 = vmatprep.subr.mxu0 0.0
    %1644 = vmatpush2.msra.mxu0 0.0
    %1645 = vmatprep.subr.mxu0 0.0
    %1646 = vmatpush2.msra.mxu0 0.0
    %1647 = vmatprep.subr.mxu0 0.0
    %1648 = vmatpush2.msra.mxu0 0.0
    %1649 = vmatprep.subr.mxu0 0.0
    %1650 = vmatpush2.msra.mxu0 0.0
    %1651 = vmatprep.mubr.f32.mxu0 0.0
    %1652 = vmatmul.mubr.f32.gmra.mxu0 %v1514
    %v1653 = vpop.f32.mrf.mxu0
    %v1654 = vadd.f32 %v1511, %v1653
    %v1655 = vpop.f32.mrf.mxu0
    %v1656 = vadd.f32 %v1511, %v1655
    %1657 = vdwg.mxu0
    %1658 = vst [vmem:[#allocation11] sm:$0xff] %v1583
    %1659 = vst [vmem:[#allocation11 + $0x8] sm:$0xff] %v1585
    %s1660 = scalar_lea.vmem [#allocation11], 16
    %1661 = vst [vmem:[%s1660] sm:$0xff] %v1654
    %1662 = vst [vmem:[%s1660 + $0x8] sm:$0xff] %v1656
    // Predicated region
    $region38: #{tpu_custom_call.1} parent=1 // pred_check
      _
    $region39: #{tpu_custom_call.1} parent=1 // pred_check_branch
      %1664 = sbr.rel (0) target = $region41
    $region40: #{tpu_custom_call.1} parent=1 // pred_region
      %s1666 = ssub.s32 512, 512
      %1667 = vsyncadd [#allocation5], %s1666
      %s1668 = sshll.u32 [#allocation11], 4
      %s1669 = int_to_ptr.vmem [resolvable:$true] %s1668
      %1674 = dma.vmem_to_hbm [thread:$0]  %s1669, 512, %s5, [#allocation5], 256, 256, 16
    $region41: #{tpu_custom_call.1} parent=1 // pred_fallthru
      _
    // Predicated region
    $region42: #{tpu_custom_call.1} parent=1 // pred_check
      _
    $region43: #{tpu_custom_call.1} parent=1 // pred_check_branch
      %1676 = sbr.rel (0) target = $region45
    $region44: #{tpu_custom_call.1} parent=1 // pred_region
      %1677 = dma.done [#allocation5], 512
    $region45: #{tpu_custom_call.1} parent=1 // pred_fallthru
      _
    %1678 = vsyncpa [#allocation4], 1
    %1679 = vsyncpa [#allocation7], 1
    %1680 = vsyncpa [#allocation10], 1
    %1681 = vsyncpa [#allocation5], 1

</llo_original>
